<compile_context>
chip_gen: v5e
topology: v5e:2x2
jax: 0.10.0
libtpu: 0.0.40
codegen_flags: <defaults>
</compile_context>

<pallas_src>
import functools
import math

import jax
import jax.numpy as jnp
from jax.experimental import pallas as pl
from jax.experimental.pallas import tpu as pltpu


def mha_kernel(
    q_ref, k_ref, v_ref, mask_ref,
    wq_ref, bq_ref, wk_ref, bk_ref, wv_ref, bv_ref, wo_ref, bo_ref,
    out_ref,
    *, num_heads: int, d_k: int,
):
    # Grid = (batch, query-tile).  K/V and all weights are resident per step.
    tq = q_ref.shape[1]
    t_kv = k_ref.shape[1]
    d_model = num_heads * d_k

    xq = q_ref[0]                        # (tq, D)  f32
    xk = k_ref[0]                        # (T2, D)  f32
    xv = v_ref[0]                        # (T2, D)  f32
    keep = mask_ref[0]                   # (tq, T2) f32, 1.0 = keep

    cdt = wq_ref.dtype                   # bf16 matmul operands, f32 accumulate

    # ---- projections (MXU, bf16 in / f32 out) -------------------------------
    # NOTE: q, k, v are independent inputs (cross-attention allowed), so the
    # Q/K/V weights cannot be fused into a single (D, 3D) matmul in general.
    q = jnp.dot(xq.astype(cdt), wq_ref[...],
                preferred_element_type=jnp.float32) + bq_ref[...]
    k = jnp.dot(xk.astype(cdt), wk_ref[...],
                preferred_element_type=jnp.float32) + bk_ref[...]
    v = jnp.dot(xv.astype(cdt), wv_ref[...],
                preferred_element_type=jnp.float32) + bv_ref[...]

    # fold 1/sqrt(d_k) into q once: O(tq*D) instead of O(H*tq*T2)
    q = q * (1.0 / math.sqrt(d_k))

    qh = q.reshape(tq, num_heads, d_k).astype(cdt)
    kh = k.reshape(t_kv, num_heads, d_k).astype(cdt)
    vh = v.reshape(t_kv, num_heads, d_k).astype(cdt)

    # ---- all heads in one batched matmul -------------------------------------
    scores = jnp.einsum("qhd,khd->hqk", qh, kh,
                        preferred_element_type=jnp.float32)      # (H, tq, T2)

    # additive mask bias (finite -> no NaN even if a whole row is masked)
    scores = scores + ((keep - 1.0) * 1e9)[None, :, :]

    # ---- softmax in f32; normalize after p @ V -------------------------------
    m = jnp.max(scores, axis=-1, keepdims=True)
    p = jnp.exp(scores - m)
    l = jnp.sum(p, axis=-1, keepdims=True)                       # (H, tq, 1)

    o = jnp.einsum("hqk,khd->qhd", p.astype(cdt), vh,
                   preferred_element_type=jnp.float32)           # (tq, H, d_k)
    inv_l = pl.reciprocal(l, approx=True)                        # EUP slot
    o = o * jnp.transpose(inv_l, (1, 0, 2))                      # (tq, H, 1)

    attn = o.reshape(tq, d_model)

    # ---- output projection ----------------------------------------------------
    out = jnp.dot(attn.astype(cdt), wo_ref[...],
                  preferred_element_type=jnp.float32) + bo_ref[...]
    out_ref[0] = out.astype(out_ref.dtype)

    # TODO(synk): for very long T2, switch to flash-style online softmax over
    # KV blocks (scratch m/l/acc + "arbitrary" KV grid axis) instead of keeping
    # the full (H, tq, T2) score block live.


def multi_head_attention(q, k, v, mask, params, *, num_heads: int, q_block: int = 128):
    """q: (B,T1,D), k/v: (B,T2,D) f32; mask: bool (B,1,1,T2) or (B,1,T1,T2), True=keep."""
    B, T1, D = q.shape
    T2 = k.shape[1]
    assert D % num_heads == 0
    d_k = D // num_heads

    # query tiling (single tile when T1 is small / not divisible)
    tq = q_block if (T1 % q_block == 0) else T1
    n_q = T1 // tq

    # mask (B, 1, 1|T1, T2) bool -> (B, T1, T2) f32 keep-mask
    mask_f = jnp.broadcast_to(
        jnp.squeeze(mask, axis=1).astype(jnp.float32), (B, T1, T2))

    bf16 = jnp.bfloat16
    wq = params["wq"].astype(bf16)
    wk = params["wk"].astype(bf16)
    wv = params["wv"].astype(bf16)
    wo = params["wo"].astype(bf16)
    # biases as (1, D) blocks -> lane-dense broadcast adds
    bq = params["bq"].reshape(1, D).astype(jnp.float32)
    bk = params["bk"].reshape(1, D).astype(jnp.float32)
    bv = params["bv"].reshape(1, D).astype(jnp.float32)
    bo = params["bo"].reshape(1, D).astype(jnp.float32)

    rep = lambda shape: pl.BlockSpec(shape, lambda b, i: (0,) * len(shape))
    in_specs = [
        pl.BlockSpec((1, tq, D), lambda b, i: (b, i, 0)),    # q tile
        pl.BlockSpec((1, T2, D), lambda b, i: (b, 0, 0)),    # k (full)
        pl.BlockSpec((1, T2, D), lambda b, i: (b, 0, 0)),    # v (full)
        pl.BlockSpec((1, tq, T2), lambda b, i: (b, i, 0)),   # mask tile
        rep((D, D)), rep((1, D)),                            # wq, bq
        rep((D, D)), rep((1, D)),                            # wk, bk
        rep((D, D)), rep((1, D)),                            # wv, bv
        rep((D, D)), rep((1, D)),                            # wo, bo
    ]

    kernel = functools.partial(mha_kernel, num_heads=num_heads, d_k=d_k)

    return pl.pallas_call(
        kernel,
        out_shape=jax.ShapeDtypeStruct((B, T1, D), q.dtype),
        grid=(B, n_q),
        in_specs=in_specs,
        out_specs=pl.BlockSpec((1, tq, D), lambda b, i: (b, i, 0)),
        compiler_params=pltpu.CompilerParams(
            dimension_semantics=("parallel", "parallel"),
            vmem_limit_bytes=32 * 1024 * 1024,
        ),
    )(q, k, v, mask_f, wq, bq, wk, bk, wv, bv, wo, bo)


def mha_reference(q, k, v, mask, params, *, num_heads: int):
    """Pure-JAX reference matching the PyTorch module (dropout = identity)."""
    B, T1, D = q.shape
    T2 = k.shape[1]
    d_k = D // num_heads
    qp = q @ params["wq"] + params["bq"]
    kp = k @ params["wk"] + params["bk"]
    vp = v @ params["wv"] + params["bv"]
    qh = qp.reshape(B, T1, num_heads, d_k).transpose(0, 2, 1, 3)
    kh = kp.reshape(B, T2, num_heads, d_k).transpose(0, 2, 1, 3)
    vh = vp.reshape(B, T2, num_heads, d_k).transpose(0, 2, 1, 3)
    scores = (qh @ kh.transpose(0, 1, 3, 2)) / math.sqrt(d_k)
    scores = jnp.where(mask, scores, -1e9)
    p = jax.nn.softmax(scores, axis=-1)
    o = (p @ vh).transpose(0, 2, 1, 3).reshape(B, T1, D)
    return o @ params["wo"] + params["bo"]


def init_params(key, d_model):
    ks = jax.random.split(key, 4)

    def lin(k_, fan_in, fan_out):
        # (in, out) layout so the kernel does x @ W + b
        return jax.random.normal(k_, (fan_in, fan_out), jnp.float32) / math.sqrt(fan_in)

    z = lambda: jnp.zeros((d_model,), jnp.float32)
    return dict(
        wq=lin(ks[0], d_model, d_model), bq=z(),
        wk=lin(ks[1], d_model, d_model), bk=z(),
        wv=lin(ks[2], d_model, d_model), bv=z(),
        wo=lin(ks[3], d_model, d_model), bo=z(),
    )


if __name__ == "__main__":
    B, T, D, H = 2, 8, 32, 4
    key = jax.random.PRNGKey(0)
    kq, kk, kv, kp = jax.random.split(key, 4)

    q = jax.random.normal(kq, (B, T, D), jnp.float32)
    k = jax.random.normal(kk, (B, T, D), jnp.float32)
    v = jax.random.normal(kv, (B, T, D), jnp.float32)

    # boolean mask (B, 1, 1, T2), True = attend; mask the last key of batch 1
    mask = jnp.ones((B, 1, 1, T), jnp.bool_)
    mask = mask.at[1, 0, 0, T - 1].set(False)

    params = init_params(kp, D)

    out = multi_head_attention(q, k, v, mask, params, num_heads=H)
    jax.block_until_ready(out)

    ref = mha_reference(q, k, v, mask, params, num_heads=H)
    err = float(jnp.max(jnp.abs(out - ref)))

    assert out.shape == (B, T, D)
    assert bool(jnp.all(jnp.isfinite(out)))
    assert err < 1e-1, f"max abs err vs reference: {err}"
    print("KERNEL_OK")
</pallas_src>

<mosaic_0001>
module attributes {stable_mosaic.version = 11 : i64} {
  func.func @mha_kernel(%arg0: i32, %arg1: i32, %arg2: memref<1x8x32xf32, #tpu.memory_space<vmem>>, %arg3: memref<1x8x32xf32, #tpu.memory_space<vmem>>, %arg4: memref<1x8x32xf32, #tpu.memory_space<vmem>>, %arg5: memref<1x8x8xf32, #tpu.memory_space<vmem>>, %arg6: memref<32x32xbf16, #tpu.memory_space<vmem>>, %arg7: memref<1x32xf32, #tpu.memory_space<vmem>>, %arg8: memref<32x32xbf16, #tpu.memory_space<vmem>>, %arg9: memref<1x32xf32, #tpu.memory_space<vmem>>, %arg10: memref<32x32xbf16, #tpu.memory_space<vmem>>, %arg11: memref<1x32xf32, #tpu.memory_space<vmem>>, %arg12: memref<32x32xbf16, #tpu.memory_space<vmem>>, %arg13: memref<1x32xf32, #tpu.memory_space<vmem>>, %arg14: memref<1x8x32xf32, #tpu.memory_space<vmem>>) attributes {dimension_semantics = [#tpu.dimension_semantics<parallel>, #tpu.dimension_semantics<parallel>], iteration_bounds = array<i64: 2, 1>, scalar_prefetch = 0 : i64, scratch_operands = 0 : i64, tpu.core_type = #tpu.core_type<tc>, window_params = [{transform_indices = @transform_0, window_bounds = array<i64: 1, 8, 32>}, {transform_indices = @transform_1, window_bounds = array<i64: 1, 8, 32>}, {transform_indices = @transform_2, window_bounds = array<i64: 1, 8, 32>}, {transform_indices = @transform_3, window_bounds = array<i64: 1, 8, 8>}, {pipeline_mode = #tpu.pipeline_mode<synchronous>, transform_indices = @transform_4, window_bounds = array<i64: 32, 32>}, {pipeline_mode = #tpu.pipeline_mode<synchronous>, transform_indices = @transform_5, window_bounds = array<i64: 1, 32>}, {pipeline_mode = #tpu.pipeline_mode<synchronous>, transform_indices = @transform_6, window_bounds = array<i64: 32, 32>}, {pipeline_mode = #tpu.pipeline_mode<synchronous>, transform_indices = @transform_7, window_bounds = array<i64: 1, 32>}, {pipeline_mode = #tpu.pipeline_mode<synchronous>, transform_indices = @transform_8, window_bounds = array<i64: 32, 32>}, {pipeline_mode = #tpu.pipeline_mode<synchronous>, transform_indices = @transform_9, window_bounds = array<i64: 1, 32>}, {pipeline_mode = #tpu.pipeline_mode<synchronous>, transform_indices = @transform_10, window_bounds = array<i64: 32, 32>}, {pipeline_mode = #tpu.pipeline_mode<synchronous>, transform_indices = @transform_11, window_bounds = array<i64: 1, 32>}, {transform_indices = @transform_12, window_bounds = array<i64: 1, 8, 32>}]} {
    %c0 = arith.constant 0 : index
    %c0_0 = arith.constant 0 : index
    %c0_1 = arith.constant 0 : index
    %0 = vector.load %arg2[%c0, %c0_0, %c0_1] : memref<1x8x32xf32, #tpu.memory_space<vmem>>, vector<1x8x32xf32>
    %1 = vector.shape_cast %0 : vector<1x8x32xf32> to vector<8x32xf32>
    %c0_2 = arith.constant 0 : index
    %c0_3 = arith.constant 0 : index
    %c0_4 = arith.constant 0 : index
    %2 = vector.load %arg3[%c0_2, %c0_3, %c0_4] : memref<1x8x32xf32, #tpu.memory_space<vmem>>, vector<1x8x32xf32>
    %3 = vector.shape_cast %2 : vector<1x8x32xf32> to vector<8x32xf32>
    %c0_5 = arith.constant 0 : index
    %c0_6 = arith.constant 0 : index
    %c0_7 = arith.constant 0 : index
    %4 = vector.load %arg4[%c0_5, %c0_6, %c0_7] : memref<1x8x32xf32, #tpu.memory_space<vmem>>, vector<1x8x32xf32>
    %5 = vector.shape_cast %4 : vector<1x8x32xf32> to vector<8x32xf32>
    %c0_8 = arith.constant 0 : index
    %c0_9 = arith.constant 0 : index
    %c0_10 = arith.constant 0 : index
    %6 = vector.load %arg5[%c0_8, %c0_9, %c0_10] : memref<1x8x8xf32, #tpu.memory_space<vmem>>, vector<1x8x8xf32>
    %7 = vector.shape_cast %6 : vector<1x8x8xf32> to vector<8x8xf32>
    %8 = arith.truncf %1 : vector<8x32xf32> to vector<8x32xbf16>
    %c0_11 = arith.constant 0 : index
    %c0_12 = arith.constant 0 : index
    %9 = vector.load %arg6[%c0_11, %c0_12] : memref<32x32xbf16, #tpu.memory_space<vmem>>, vector<32x32xbf16>
    %cst = arith.constant dense<0.000000e+00> : vector<8x32xf32>
    %10 = tpu.matmul %8, %9, %cst {dimension_numbers = #tpu.dot_dimension_numbers<[1], [0], [0], [1], [0, 0, 1, 1], [], []>} : vector<8x32xbf16>, vector<32x32xbf16>, vector<8x32xf32> -> vector<8x32xf32>
    %c0_13 = arith.constant 0 : index
    %c0_14 = arith.constant 0 : index
    %11 = vector.load %arg7[%c0_13, %c0_14] : memref<1x32xf32, #tpu.memory_space<vmem>>, vector<1x32xf32>
    %12 = vector.broadcast %11 : vector<1x32xf32> to vector<8x32xf32>
    %13 = arith.addf %10, %12 : vector<8x32xf32>
    %14 = arith.truncf %3 : vector<8x32xf32> to vector<8x32xbf16>
    %c0_15 = arith.constant 0 : index
    %c0_16 = arith.constant 0 : index
    %15 = vector.load %arg8[%c0_15, %c0_16] : memref<32x32xbf16, #tpu.memory_space<vmem>>, vector<32x32xbf16>
    %cst_17 = arith.constant dense<0.000000e+00> : vector<8x32xf32>
    %16 = tpu.matmul %14, %15, %cst_17 {dimension_numbers = #tpu.dot_dimension_numbers<[1], [0], [0], [1], [0, 0, 1, 1], [], []>} : vector<8x32xbf16>, vector<32x32xbf16>, vector<8x32xf32> -> vector<8x32xf32>
    %c0_18 = arith.constant 0 : index
    %c0_19 = arith.constant 0 : index
    %17 = vector.load %arg9[%c0_18, %c0_19] : memref<1x32xf32, #tpu.memory_space<vmem>>, vector<1x32xf32>
    %18 = vector.broadcast %17 : vector<1x32xf32> to vector<8x32xf32>
    %19 = arith.addf %16, %18 : vector<8x32xf32>
    %20 = arith.truncf %5 : vector<8x32xf32> to vector<8x32xbf16>
    %c0_20 = arith.constant 0 : index
    %c0_21 = arith.constant 0 : index
    %21 = vector.load %arg10[%c0_20, %c0_21] : memref<32x32xbf16, #tpu.memory_space<vmem>>, vector<32x32xbf16>
    %cst_22 = arith.constant dense<0.000000e+00> : vector<8x32xf32>
    %22 = tpu.matmul %20, %21, %cst_22 {dimension_numbers = #tpu.dot_dimension_numbers<[1], [0], [0], [1], [0, 0, 1, 1], [], []>} : vector<8x32xbf16>, vector<32x32xbf16>, vector<8x32xf32> -> vector<8x32xf32>
    %c0_23 = arith.constant 0 : index
    %c0_24 = arith.constant 0 : index
    %23 = vector.load %arg11[%c0_23, %c0_24] : memref<1x32xf32, #tpu.memory_space<vmem>>, vector<1x32xf32>
    %24 = vector.broadcast %23 : vector<1x32xf32> to vector<8x32xf32>
    %25 = arith.addf %22, %24 : vector<8x32xf32>
    %cst_25 = arith.constant 0.353553385 : f32
    %26 = vector.broadcast %cst_25 : f32 to vector<8x32xf32>
    %27 = arith.mulf %13, %26 : vector<8x32xf32>
    %28 = vector.shape_cast %27 : vector<8x32xf32> to vector<8x4x8xf32>
    %29 = arith.truncf %28 : vector<8x4x8xf32> to vector<8x4x8xbf16>
    %30 = vector.shape_cast %19 : vector<8x32xf32> to vector<8x4x8xf32>
    %31 = arith.truncf %30 : vector<8x4x8xf32> to vector<8x4x8xbf16>
    %32 = vector.shape_cast %25 : vector<8x32xf32> to vector<8x4x8xf32>
    %33 = arith.truncf %32 : vector<8x4x8xf32> to vector<8x4x8xbf16>
    "tpu.trace_start"() <{level = 10 : i32, message = "qhd,khd->hqk"}> : () -> ()
    %cst_26 = arith.constant dense<0.000000e+00> : vector<4x8x8xf32>
    %34 = tpu.matmul %29, %31, %cst_26 {dimension_numbers = #tpu.dot_dimension_numbers<[2], [2], [0], [0], [0, 1, 0, 0, 1, 0], [1], [1]>} : vector<8x4x8xbf16>, vector<8x4x8xbf16>, vector<4x8x8xf32> -> vector<4x8x8xf32>
    "tpu.trace_stop"() : () -> ()
    %cst_27 = arith.constant 1.000000e+00 : f32
    %35 = vector.broadcast %cst_27 : f32 to vector<8x8xf32>
    %36 = arith.subf %7, %35 : vector<8x8xf32>
    %cst_28 = arith.constant 1.000000e+09 : f32
    %37 = vector.broadcast %cst_28 : f32 to vector<8x8xf32>
    %38 = arith.mulf %36, %37 : vector<8x8xf32>
    %39 = vector.shape_cast %38 : vector<8x8xf32> to vector<1x8x8xf32>
    %40 = vector.broadcast %39 : vector<1x8x8xf32> to vector<4x8x8xf32>
    %41 = arith.addf %34, %40 : vector<4x8x8xf32>
    %cst_29 = arith.constant dense<0xFF800000> : vector<4x8xf32>
    %42 = vector.multi_reduction <maximumf>, %41, %cst_29 [2] : vector<4x8x8xf32> to vector<4x8xf32>
    %43 = vector.shape_cast %42 : vector<4x8xf32> to vector<4x8x1xf32>
    %44 = vector.broadcast %43 : vector<4x8x1xf32> to vector<4x8x8xf32>
    %45 = arith.subf %41, %44 : vector<4x8x8xf32>
    %46 = math.exp %45 : vector<4x8x8xf32>
    %cst_30 = arith.constant dense<0.000000e+00> : vector<4x8xf32>
    %47 = vector.multi_reduction <add>, %46, %cst_30 [2] : vector<4x8x8xf32> to vector<4x8xf32>
    %48 = vector.shape_cast %47 : vector<4x8xf32> to vector<4x8x1xf32>
    %49 = arith.truncf %46 : vector<4x8x8xf32> to vector<4x8x8xbf16>
    "tpu.trace_start"() <{level = 10 : i32, message = "hqk,khd->qhd"}> : () -> ()
    %cst_31 = arith.constant dense<0.000000e+00> : vector<4x8x8xf32>
    %50 = tpu.matmul %33, %49, %cst_31 {dimension_numbers = #tpu.dot_dimension_numbers<[0], [2], [2], [1], [0, 1, 0, 2, 1, 1], [1], [0]>} : vector<8x4x8xbf16>, vector<4x8x8xbf16>, vector<4x8x8xf32> -> vector<4x8x8xf32>
    %51 = tpu.transpose %50, [2, 0, 1] : vector<4x8x8xf32> -> vector<8x4x8xf32>
    "tpu.trace_stop"() : () -> ()
    %52 = tpu.reciprocal %48 {approx = true} : vector<4x8x1xf32> -> vector<4x8x1xf32>
    %53 = tpu.transpose %52, [1, 0, 2] : vector<4x8x1xf32> -> vector<8x4x1xf32>
    %54 = vector.broadcast %53 : vector<8x4x1xf32> to vector<8x4x8xf32>
    %55 = arith.mulf %51, %54 : vector<8x4x8xf32>
    %56 = vector.shape_cast %55 : vector<8x4x8xf32> to vector<8x32xf32>
    %57 = arith.truncf %56 : vector<8x32xf32> to vector<8x32xbf16>
    %c0_32 = arith.constant 0 : index
    %c0_33 = arith.constant 0 : index
    %58 = vector.load %arg12[%c0_32, %c0_33] : memref<32x32xbf16, #tpu.memory_space<vmem>>, vector<32x32xbf16>
    %cst_34 = arith.constant dense<0.000000e+00> : vector<8x32xf32>
    %59 = tpu.matmul %57, %58, %cst_34 {dimension_numbers = #tpu.dot_dimension_numbers<[1], [0], [0], [1], [0, 0, 1, 1], [], []>} : vector<8x32xbf16>, vector<32x32xbf16>, vector<8x32xf32> -> vector<8x32xf32>
    %c0_35 = arith.constant 0 : index
    %c0_36 = arith.constant 0 : index
    %60 = vector.load %arg13[%c0_35, %c0_36] : memref<1x32xf32, #tpu.memory_space<vmem>>, vector<1x32xf32>
    %61 = vector.broadcast %60 : vector<1x32xf32> to vector<8x32xf32>
    %62 = arith.addf %59, %61 : vector<8x32xf32>
    %c0_37 = arith.constant 0 : index
    %c0_38 = arith.constant 0 : index
    %c0_39 = arith.constant 0 : index
    %63 = vector.load %arg14[%c0_37, %c0_38, %c0_39] : memref<1x8x32xf32, #tpu.memory_space<vmem>>, vector<1x8x32xf32>
    %64 = vector.shape_cast %63 : vector<1x8x32xf32> to vector<8x32xf32>
    %65 = vector.shape_cast %62 : vector<8x32xf32> to vector<1x8x32xf32>
    tpu.vector_store %arg14[%c0_37, %c0_38, %c0_39], %65 {strides = array<i32>} : memref<1x8x32xf32, #tpu.memory_space<vmem>>, vector<1x8x32xf32>,
    return
  }
  func.func @transform_0(%arg0: i32, %arg1: i32) -> (i32, i32, i32) {
    %c0_i32 = arith.constant 0 : i32
    %c0_i32_0 = arith.constant 0 : i32
    return %arg0, %arg1, %c0_i32 : i32, i32, i32
  }
  func.func @transform_1(%arg0: i32, %arg1: i32) -> (i32, i32, i32) {
    %c0_i32 = arith.constant 0 : i32
    %c0_i32_0 = arith.constant 0 : i32
    %c0_i32_1 = arith.constant 0 : i32
    return %arg0, %c0_i32, %c0_i32_0 : i32, i32, i32
  }
  func.func @transform_2(%arg0: i32, %arg1: i32) -> (i32, i32, i32) {
    %c0_i32 = arith.constant 0 : i32
    %c0_i32_0 = arith.constant 0 : i32
    %c0_i32_1 = arith.constant 0 : i32
    return %arg0, %c0_i32, %c0_i32_0 : i32, i32, i32
  }
  func.func @transform_3(%arg0: i32, %arg1: i32) -> (i32, i32, i32) {
    %c0_i32 = arith.constant 0 : i32
    %c0_i32_0 = arith.constant 0 : i32
    return %arg0, %arg1, %c0_i32 : i32, i32, i32
  }
  func.func @transform_4(%arg0: i32, %arg1: i32) -> (i32, i32) {
    %c0_i32 = arith.constant 0 : i32
    %c0_i32_0 = arith.constant 0 : i32
    %c0_i32_1 = arith.constant 0 : i32
    return %c0_i32, %c0_i32_0 : i32, i32
  }
  func.func @transform_5(%arg0: i32, %arg1: i32) -> (i32, i32) {
    %c0_i32 = arith.constant 0 : i32
    %c0_i32_0 = arith.constant 0 : i32
    %c0_i32_1 = arith.constant 0 : i32
    return %c0_i32, %c0_i32_0 : i32, i32
  }
  func.func @transform_6(%arg0: i32, %arg1: i32) -> (i32, i32) {
    %c0_i32 = arith.constant 0 : i32
    %c0_i32_0 = arith.constant 0 : i32
    %c0_i32_1 = arith.constant 0 : i32
    return %c0_i32, %c0_i32_0 : i32, i32
  }
  func.func @transform_7(%arg0: i32, %arg1: i32) -> (i32, i32) {
    %c0_i32 = arith.constant 0 : i32
    %c0_i32_0 = arith.constant 0 : i32
    %c0_i32_1 = arith.constant 0 : i32
    return %c0_i32, %c0_i32_0 : i32, i32
  }
  func.func @transform_8(%arg0: i32, %arg1: i32) -> (i32, i32) {
    %c0_i32 = arith.constant 0 : i32
    %c0_i32_0 = arith.constant 0 : i32
    %c0_i32_1 = arith.constant 0 : i32
    return %c0_i32, %c0_i32_0 : i32, i32
  }
  func.func @transform_9(%arg0: i32, %arg1: i32) -> (i32, i32) {
    %c0_i32 = arith.constant 0 : i32
    %c0_i32_0 = arith.constant 0 : i32
    %c0_i32_1 = arith.constant 0 : i32
    return %c0_i32, %c0_i32_0 : i32, i32
  }
  func.func @transform_10(%arg0: i32, %arg1: i32) -> (i32, i32) {
    %c0_i32 = arith.constant 0 : i32
    %c0_i32_0 = arith.constant 0 : i32
    %c0_i32_1 = arith.constant 0 : i32
    return %c0_i32, %c0_i32_0 : i32, i32
  }
  func.func @transform_11(%arg0: i32, %arg1: i32) -> (i32, i32) {
    %c0_i32 = arith.constant 0 : i32
    %c0_i32_0 = arith.constant 0 : i32
    %c0_i32_1 = arith.constant 0 : i32
    return %c0_i32, %c0_i32_0 : i32, i32
  }
  func.func @transform_12(%arg0: i32, %arg1: i32) -> (i32, i32, i32) {
    %c0_i32 = arith.constant 0 : i32
    %c0_i32_0 = arith.constant 0 : i32
    return %arg0, %arg1, %c0_i32 : i32, i32, i32
  }
}

</mosaic_0001>

<llo_original>
// kernel: tpu_custom_call.1
$region0: #{tpu_custom_call.1}
  #allocation0 [shape = 'u32[]', space=smem, size = 0x4, offset = 0x4, fixed_abs, tag = 'smem constant byte address 0x4 - core index']
  #allocation1 [shape = 'u32[72,128]{1,0:T(1,128)}', space=vmem, size = 0x9000, scoped, tag = 'internal scratch']
  %s0 = inlined_call_operand.hbm [shape: f32[2,8,32], index: 0, kind: input, shape index: {}]
  %s1 = inlined_call_operand.hbm [shape: f32[2,8,32], index: 1, kind: input, shape index: {}]
  %s2 = inlined_call_operand.hbm [shape: f32[2,8,32], index: 2, kind: input, shape index: {}]
  %s3 = inlined_call_operand.hbm [shape: f32[2,8,8], index: 3, kind: input, shape index: {}]
  %s4 = inlined_call_operand.hbm [shape: bf16[32,32], index: 4, kind: input, shape index: {}]
  %s5 = inlined_call_operand.vmem [shape: f32[1,32], index: 5, kind: input, shape index: {}]
  %s6 = inlined_call_operand.hbm [shape: bf16[32,32], index: 6, kind: input, shape index: {}]
  %s7 = inlined_call_operand.vmem [shape: f32[1,32], index: 7, kind: input, shape index: {}]
  %s8 = inlined_call_operand.hbm [shape: bf16[32,32], index: 8, kind: input, shape index: {}]
  %s9 = inlined_call_operand.vmem [shape: f32[1,32], index: 9, kind: input, shape index: {}]
  %s10 = inlined_call_operand.hbm [shape: bf16[32,32], index: 10, kind: input, shape index: {}]
  %s11 = inlined_call_operand.vmem [shape: f32[1,32], index: 11, kind: input, shape index: {}]
  %s12 = inlined_call_operand.hbm [shape: f32[2,8,32], index: 12, kind: output, shape index: {}]
  %s13 = sld [smem:[#allocation0]]
  $region113: #{tpu_custom_call.1} parent=0
    _
  %s15 = ssub.s32 1, %s13
  %s16 = scalar_select 0, %s15, %s13
  $region1: #{tpu_custom_call.1} parent=0
    #allocation2 [shape = 'u8[8192]{0}', space=vmem, size = 0x2000, scoped, tag = 'input window, operand 0']
    #allocation3 [shape = 's32[2]{0}', space=sflag, size = 0x8, scoped, tag = 'scoped memory for tpu_custom_call.1']
    #allocation4 [shape = 's32[2]{0}', space=sflag, size = 0x8, scoped, tag = 'scoped memory for tpu_custom_call.1']
    #allocation5 [shape = 'u8[8192]{0}', space=vmem, size = 0x2000, scoped, tag = 'input window, operand 1']
    #allocation6 [shape = 's32[2]{0}', space=sflag, size = 0x8, scoped, tag = 'scoped memory for tpu_custom_call.1']
    #allocation7 [shape = 'u8[8192]{0}', space=vmem, size = 0x2000, scoped, tag = 'input window, operand 2']
    #allocation8 [shape = 'u8[8192]{0}', space=vmem, size = 0x2000, scoped, tag = 'input window, operand 3']
    #allocation9 [shape = 's32[2]{0}', space=sflag, size = 0x8, scoped, tag = 'scoped memory for tpu_custom_call.1']
    #allocation10 [shape = 'u8[8192]{0}', space=vmem, size = 0x2000, scoped, tag = 'input window, operand 4, single buffered']
    #allocation11 [shape = 'u8[8192]{0}', space=vmem, size = 0x2000, scoped, tag = 'input window, operand 6, single buffered']
    #allocation12 [shape = 's32[1]{0}', space=sflag, size = 0x4, scoped, tag = 'scoped memory for tpu_custom_call.1']
    #allocation13 [shape = 'u8[8192]{0}', space=vmem, size = 0x2000, scoped, tag = 'input window, operand 8, single buffered']
    #allocation14 [shape = 'u8[8192]{0}', space=vmem, size = 0x2000, scoped, tag = 'input window, operand 10, single buffered']
    #allocation15 [shape = 's32[1]{0}', space=sflag, size = 0x4, scoped, tag = 'scoped memory for tpu_custom_call.1']
    #allocation16 [shape = 'u8[8192]{0}', space=vmem, size = 0x2000, scoped, tag = 'output window, operand 0']
    %17 = vsyncpa [#allocation3], 0
    %s18 = scalar_lea.sflag [#allocation3], 1
    %19 = vsyncpa %s18, 0
    %20 = vsyncpa [#allocation6], 0
    %s21 = scalar_lea.sflag [#allocation6], 1
    %22 = vsyncpa %s21, 0
    %23 = vsyncpa [#allocation9], 0
    %s24 = scalar_lea.sflag [#allocation9], 1
    %25 = vsyncpa %s24, 0
    %26 = vsyncpa [#allocation12], 0
    %27 = vsyncpa [#allocation15], 0
    %28 = vsyncpa [#allocation4], 0
    %s29 = scalar_lea.sflag [#allocation4], 1
    %30 = vsyncpa %s29, 0
    loop: start=0, step=1, limit=4
    $region2: #{tpu_custom_call.1} parent=1 // loop_pre_header
      _
    $region3: #{tpu_custom_call.1} parent=1 // loop_header
      %s32 = sphi 0, %s36
      %p33 = scmp.ge.s32.totalorder %s32, 4
      %s39 = sphi 0, %s51
      %s40 = sphi 0, %s47
      %s41 = sphi 0, %s39
      %s42 = sphi 0, %s40
      %s43 = sphi 0, %s41
      %s44 = sphi 0, %s42
      %s56 = sphi 0, %s58
      %s59 = sphi 0, %s56
      %s60 = sphi 0, %s59
      %s76 = sphi 0, %s60
      %s82 = sphi 0, %s84
      %s85 = sphi 0, %s82
      %s86 = sphi 0, %s85
      %s102 = sphi 0, %s86
      %s108 = sphi 0, %s110
      %s111 = sphi 0, %s108
      %s112 = sphi 0, %s111
      %s128 = sphi 0, %s112
      %s136 = sphi 0, %s138
      %s139 = sphi 0, %s136
      %s140 = sphi 0, %s139
      %s156 = sphi 0, %s140
      %s160 = sphi 0, %s160
      %s162 = sphi 0, %s160
      %s163 = sphi 0, %s162
      %s177 = sphi 0, %s163
      %s181 = sphi 0, %s181
      %s183 = sphi 0, %s181
      %s184 = sphi 0, %s183
      %s198 = sphi 0, %s184
      %s202 = sphi 0, %s202
      %s204 = sphi 0, %s202
      %s205 = sphi 0, %s204
      %s219 = sphi 0, %s205
      %s223 = sphi 0, %s223
      %s225 = sphi 0, %s223
      %s226 = sphi 0, %s225
      %s240 = sphi 0, %s226
      %s244 = sphi 0, %s244
      %s246 = sphi 0, %s244
      %s247 = sphi 0, %s246
      %s261 = sphi 0, %s247
      %s265 = sphi 0, %s265
      %s267 = sphi 0, %s265
      %s268 = sphi 0, %s267
      %s282 = sphi 0, %s268
      %s286 = sphi 0, %s286
      %s288 = sphi 0, %s286
      %s289 = sphi 0, %s288
      %s303 = sphi 0, %s289
      %s307 = sphi 0, %s307
      %s309 = sphi 0, %s307
      %s310 = sphi 0, %s309
      %s324 = sphi 0, %s310
      %s332 = sphi 0, %s334
      %s335 = sphi 0, %s332
      %s336 = sphi 0, %s335
      %s352 = sphi 0, %s336
    $region4: #{tpu_custom_call.1} parent=1 // loop_header_branch
      %35 = sbr.rel (%p33) target = $region8
    $region5: #{tpu_custom_call.1} parent=1 // loop_body
      %s37 = ssub.s32 %s32, 1
      %s38 = ssub.s32 %s32, 2
      %s45 = sadd.s32 1, %s40
      %p46 = scmp.ge.s32.totalorder %s45, 1
      %s47 = scalar_select %p46, 0, %s45
      %s48 = sadd.s32 1, %s39
      %s49 = scalar_select %p46, %s48, %s39
      %p50 = scmp.ge.s32.totalorder %s49, 2
      %s51 = scalar_select %p50, 0, %s49
      %s52 = ssub.s32 %s39, %s51
      %s53 = ssub.s32 %s40, %s47
      %s54 = sor.u32 %s52, %s53
      %p55 = scmp.eq.s32.totalorder %s54, 0
      %s57 = sadd.s32 %s56, 1
      %s58 = scalar_select %p55, %s56, %s57
      %p61 = pneg %p55
      %p62 = scmp.eq.s32.totalorder %s32, 1
      %p63 = por %p61, %p62
      %p64 = scmp.ne.s32.totalorder %s56, %s59
      %p65 = scmp.eq.s32.totalorder %s32, 0
      %p66 = por %p64, %p65
      %p67 = scmp.ne.s32.totalorder %s56, %s59
      %p68 = scmp.eq.s32.totalorder %s37, 1
      %p69 = por %p67, %p68
      %p70 = scmp.ne.s32.totalorder %s59, %s60
      %p71 = scmp.eq.s32.totalorder %s37, 0
      %p72 = por %p70, %p71
      %p73 = scmp.ne.s32.totalorder %s59, %s60
      %p74 = scmp.eq.s32.totalorder %s38, 1
      %p75 = por %p73, %p74
      %p77 = scmp.ne.s32.totalorder %s60, %s76
      %p78 = scmp.eq.s32.totalorder %s38, 0
      %p79 = por %p77, %p78
      %s80 = ssub.s32 %s39, %s51
      %p81 = scmp.eq.s32.totalorder %s80, 0
      %s83 = sadd.s32 %s82, 1
      %s84 = scalar_select %p81, %s82, %s83
      %p87 = pneg %p81
      %p88 = scmp.eq.s32.totalorder %s32, 1
      %p89 = por %p87, %p88
      %p90 = scmp.ne.s32.totalorder %s82, %s85
      %p91 = scmp.eq.s32.totalorder %s32, 0
      %p92 = por %p90, %p91
      %p93 = scmp.ne.s32.totalorder %s82, %s85
      %p94 = scmp.eq.s32.totalorder %s37, 1
      %p95 = por %p93, %p94
      %p96 = scmp.ne.s32.totalorder %s85, %s86
      %p97 = scmp.eq.s32.totalorder %s37, 0
      %p98 = por %p96, %p97
      %p99 = scmp.ne.s32.totalorder %s85, %s86
      %p100 = scmp.eq.s32.totalorder %s38, 1
      %p101 = por %p99, %p100
      %p103 = scmp.ne.s32.totalorder %s86, %s102
      %p104 = scmp.eq.s32.totalorder %s38, 0
      %p105 = por %p103, %p104
      %s106 = ssub.s32 %s39, %s51
      %p107 = scmp.eq.s32.totalorder %s106, 0
      %s109 = sadd.s32 %s108, 1
      %s110 = scalar_select %p107, %s108, %s109
      %p113 = pneg %p107
      %p114 = scmp.eq.s32.totalorder %s32, 1
      %p115 = por %p113, %p114
      %p116 = scmp.ne.s32.totalorder %s108, %s111
      %p117 = scmp.eq.s32.totalorder %s32, 0
      %p118 = por %p116, %p117
      %p119 = scmp.ne.s32.totalorder %s108, %s111
      %p120 = scmp.eq.s32.totalorder %s37, 1
      %p121 = por %p119, %p120
      %p122 = scmp.ne.s32.totalorder %s111, %s112
      %p123 = scmp.eq.s32.totalorder %s37, 0
      %p124 = por %p122, %p123
      %p125 = scmp.ne.s32.totalorder %s111, %s112
      %p126 = scmp.eq.s32.totalorder %s38, 1
      %p127 = por %p125, %p126
      %p129 = scmp.ne.s32.totalorder %s112, %s128
      %p130 = scmp.eq.s32.totalorder %s38, 0
      %p131 = por %p129, %p130
      %s132 = ssub.s32 %s39, %s51
      %s133 = ssub.s32 %s40, %s47
      %s134 = sor.u32 %s132, %s133
      %p135 = scmp.eq.s32.totalorder %s134, 0
      %s137 = sadd.s32 %s136, 1
      %s138 = scalar_select %p135, %s136, %s137
      %p141 = pneg %p135
      %p142 = scmp.eq.s32.totalorder %s32, 1
      %p143 = por %p141, %p142
      %p144 = scmp.ne.s32.totalorder %s136, %s139
      %p145 = scmp.eq.s32.totalorder %s32, 0
      %p146 = por %p144, %p145
      %p147 = scmp.ne.s32.totalorder %s136, %s139
      %p148 = scmp.eq.s32.totalorder %s37, 1
      %p149 = por %p147, %p148
      %p150 = scmp.ne.s32.totalorder %s139, %s140
      %p151 = scmp.eq.s32.totalorder %s37, 0
      %p152 = por %p150, %p151
      %p153 = scmp.ne.s32.totalorder %s139, %s140
      %p154 = scmp.eq.s32.totalorder %s38, 1
      %p155 = por %p153, %p154
      %p157 = scmp.ne.s32.totalorder %s140, %s156
      %p158 = scmp.eq.s32.totalorder %s38, 0
      %p159 = por %p157, %p158
      %s161 = sadd.s32 %s160, 1
      %p164 = scmp.eq.s32.totalorder %s32, 1
      %p165 = scmp.ne.s32.totalorder %s160, %s162
      %p166 = scmp.eq.s32.totalorder %s32, 0
      %p167 = por %p165, %p166
      %p168 = scmp.ne.s32.totalorder %s160, %s162
      %p169 = scmp.eq.s32.totalorder %s37, 1
      %p170 = por %p168, %p169
      %p171 = scmp.ne.s32.totalorder %s162, %s163
      %p172 = scmp.eq.s32.totalorder %s37, 0
      %p173 = por %p171, %p172
      %p174 = scmp.ne.s32.totalorder %s162, %s163
      %p175 = scmp.eq.s32.totalorder %s38, 1
      %p176 = por %p174, %p175
      %p178 = scmp.ne.s32.totalorder %s163, %s177
      %p179 = scmp.eq.s32.totalorder %s38, 0
      %p180 = por %p178, %p179
      %s182 = sadd.s32 %s181, 1
      %p185 = scmp.eq.s32.totalorder %s32, 1
      %p186 = scmp.ne.s32.totalorder %s181, %s183
      %p187 = scmp.eq.s32.totalorder %s32, 0
      %p188 = por %p186, %p187
      %p189 = scmp.ne.s32.totalorder %s181, %s183
      %p190 = scmp.eq.s32.totalorder %s37, 1
      %p191 = por %p189, %p190
      %p192 = scmp.ne.s32.totalorder %s183, %s184
      %p193 = scmp.eq.s32.totalorder %s37, 0
      %p194 = por %p192, %p193
      %p195 = scmp.ne.s32.totalorder %s183, %s184
      %p196 = scmp.eq.s32.totalorder %s38, 1
      %p197 = por %p195, %p196
      %p199 = scmp.ne.s32.totalorder %s184, %s198
      %p200 = scmp.eq.s32.totalorder %s38, 0
      %p201 = por %p199, %p200
      %s203 = sadd.s32 %s202, 1
      %p206 = scmp.eq.s32.totalorder %s32, 1
      %p207 = scmp.ne.s32.totalorder %s202, %s204
      %p208 = scmp.eq.s32.totalorder %s32, 0
      %p209 = por %p207, %p208
      %p210 = scmp.ne.s32.totalorder %s202, %s204
      %p211 = scmp.eq.s32.totalorder %s37, 1
      %p212 = por %p210, %p211
      %p213 = scmp.ne.s32.totalorder %s204, %s205
      %p214 = scmp.eq.s32.totalorder %s37, 0
      %p215 = por %p213, %p214
      %p216 = scmp.ne.s32.totalorder %s204, %s205
      %p217 = scmp.eq.s32.totalorder %s38, 1
      %p218 = por %p216, %p217
      %p220 = scmp.ne.s32.totalorder %s205, %s219
      %p221 = scmp.eq.s32.totalorder %s38, 0
      %p222 = por %p220, %p221
      %s224 = sadd.s32 %s223, 1
      %p227 = scmp.eq.s32.totalorder %s32, 1
      %p228 = scmp.ne.s32.totalorder %s223, %s225
      %p229 = scmp.eq.s32.totalorder %s32, 0
      %p230 = por %p228, %p229
      %p231 = scmp.ne.s32.totalorder %s223, %s225
      %p232 = scmp.eq.s32.totalorder %s37, 1
      %p233 = por %p231, %p232
      %p234 = scmp.ne.s32.totalorder %s225, %s226
      %p235 = scmp.eq.s32.totalorder %s37, 0
      %p236 = por %p234, %p235
      %p237 = scmp.ne.s32.totalorder %s225, %s226
      %p238 = scmp.eq.s32.totalorder %s38, 1
      %p239 = por %p237, %p238
      %p241 = scmp.ne.s32.totalorder %s226, %s240
      %p242 = scmp.eq.s32.totalorder %s38, 0
      %p243 = por %p241, %p242
      %s245 = sadd.s32 %s244, 1
      %p248 = scmp.eq.s32.totalorder %s32, 1
      %p249 = scmp.ne.s32.totalorder %s244, %s246
      %p250 = scmp.eq.s32.totalorder %s32, 0
      %p251 = por %p249, %p250
      %p252 = scmp.ne.s32.totalorder %s244, %s246
      %p253 = scmp.eq.s32.totalorder %s37, 1
      %p254 = por %p252, %p253
      %p255 = scmp.ne.s32.totalorder %s246, %s247
      %p256 = scmp.eq.s32.totalorder %s37, 0
      %p257 = por %p255, %p256
      %p258 = scmp.ne.s32.totalorder %s246, %s247
      %p259 = scmp.eq.s32.totalorder %s38, 1
      %p260 = por %p258, %p259
      %p262 = scmp.ne.s32.totalorder %s247, %s261
      %p263 = scmp.eq.s32.totalorder %s38, 0
      %p264 = por %p262, %p263
      %s266 = sadd.s32 %s265, 1
      %p269 = scmp.eq.s32.totalorder %s32, 1
      %p270 = scmp.ne.s32.totalorder %s265, %s267
      %p271 = scmp.eq.s32.totalorder %s32, 0
      %p272 = por %p270, %p271
      %p273 = scmp.ne.s32.totalorder %s265, %s267
      %p274 = scmp.eq.s32.totalorder %s37, 1
      %p275 = por %p273, %p274
      %p276 = scmp.ne.s32.totalorder %s267, %s268
      %p277 = scmp.eq.s32.totalorder %s37, 0
      %p278 = por %p276, %p277
      %p279 = scmp.ne.s32.totalorder %s267, %s268
      %p280 = scmp.eq.s32.totalorder %s38, 1
      %p281 = por %p279, %p280
      %p283 = scmp.ne.s32.totalorder %s268, %s282
      %p284 = scmp.eq.s32.totalorder %s38, 0
      %p285 = por %p283, %p284
      %s287 = sadd.s32 %s286, 1
      %p290 = scmp.eq.s32.totalorder %s32, 1
      %p291 = scmp.ne.s32.totalorder %s286, %s288
      %p292 = scmp.eq.s32.totalorder %s32, 0
      %p293 = por %p291, %p292
      %p294 = scmp.ne.s32.totalorder %s286, %s288
      %p295 = scmp.eq.s32.totalorder %s37, 1
      %p296 = por %p294, %p295
      %p297 = scmp.ne.s32.totalorder %s288, %s289
      %p298 = scmp.eq.s32.totalorder %s37, 0
      %p299 = por %p297, %p298
      %p300 = scmp.ne.s32.totalorder %s288, %s289
      %p301 = scmp.eq.s32.totalorder %s38, 1
      %p302 = por %p300, %p301
      %p304 = scmp.ne.s32.totalorder %s289, %s303
      %p305 = scmp.eq.s32.totalorder %s38, 0
      %p306 = por %p304, %p305
      %s308 = sadd.s32 %s307, 1
      %p311 = scmp.eq.s32.totalorder %s32, 1
      %p312 = scmp.ne.s32.totalorder %s307, %s309
      %p313 = scmp.eq.s32.totalorder %s32, 0
      %p314 = por %p312, %p313
      %p315 = scmp.ne.s32.totalorder %s307, %s309
      %p316 = scmp.eq.s32.totalorder %s37, 1
      %p317 = por %p315, %p316
      %p318 = scmp.ne.s32.totalorder %s309, %s310
      %p319 = scmp.eq.s32.totalorder %s37, 0
      %p320 = por %p318, %p319
      %p321 = scmp.ne.s32.totalorder %s309, %s310
      %p322 = scmp.eq.s32.totalorder %s38, 1
      %p323 = por %p321, %p322
      %p325 = scmp.ne.s32.totalorder %s310, %s324
      %p326 = scmp.eq.s32.totalorder %s38, 0
      %p327 = por %p325, %p326
      %s328 = ssub.s32 %s39, %s51
      %s329 = ssub.s32 %s40, %s47
      %s330 = sor.u32 %s328, %s329
      %p331 = scmp.eq.s32.totalorder %s330, 0
      %s333 = sadd.s32 %s332, 1
      %s334 = scalar_select %p331, %s332, %s333
      %p337 = pneg %p331
      %p338 = scmp.eq.s32.totalorder %s32, 1
      %p339 = por %p337, %p338
      %p340 = scmp.ne.s32.totalorder %s332, %s335
      %p341 = scmp.eq.s32.totalorder %s32, 0
      %p342 = por %p340, %p341
      %p343 = scmp.ne.s32.totalorder %s332, %s335
      %p344 = scmp.eq.s32.totalorder %s37, 1
      %p345 = por %p343, %p344
      %p346 = scmp.ne.s32.totalorder %s335, %s336
      %p347 = scmp.eq.s32.totalorder %s37, 0
      %p348 = por %p346, %p347
      %p349 = scmp.ne.s32.totalorder %s335, %s336
      %p350 = scmp.eq.s32.totalorder %s38, 1
      %p351 = por %p349, %p350
      %p353 = scmp.ne.s32.totalorder %s336, %s352
      %p354 = scmp.eq.s32.totalorder %s38, 0
      %p355 = por %p353, %p354
      %p356 = scmp.le.s32.totalorder 1, %s32
      %p357 = scmp.lt.s32.totalorder %s32, 3
      %p358 = pnand %p356, %p357
      %p359 = pneg %p358
      // Predicated region
      $region9: #{tpu_custom_call.1} parent=5 // pred_check
        _
      $region10: #{tpu_custom_call.1} parent=5 // pred_check_branch
        %361 = sbr.rel (%p358) target = $region12
      $region11: #{tpu_custom_call.1} parent=5 // pred_region
        %s362 = ssub.s32 %s32, 1
        // Predicated region
        $region13: #{tpu_custom_call.1} parent=11 // pred_check
          %p363 = pneg %p173
        $region14: #{tpu_custom_call.1} parent=11 // pred_check_branch
          %365 = sbr.rel (%p363) target = $region16
        $region15: #{tpu_custom_call.1} parent=11 // pred_region
          %367 = vsyncadd [#allocation9], 0
          %s368 = sshll.u32 %s4, 4
          %s369 = int_to_ptr.hbm [resolvable:$true] %s368
          %s370 = sshll.u32 [#allocation10], 4
          %s371 = int_to_ptr.vmem [resolvable:$true] %s370
          %376 = dma.hbm_to_vmem [thread:$0]  %s369, 256, %s371, [#allocation9], 64, 64, 4
        $region16: #{tpu_custom_call.1} parent=11 // pred_fallthru
          _
        // Predicated region
        $region17: #{tpu_custom_call.1} parent=11 // pred_check
          %p377 = pneg %p194
        $region18: #{tpu_custom_call.1} parent=11 // pred_check_branch
          %379 = sbr.rel (%p377) target = $region20
        $region19: #{tpu_custom_call.1} parent=11 // pred_region
          _
        $region20: #{tpu_custom_call.1} parent=11 // pred_fallthru
          _
        // Predicated region
        $region21: #{tpu_custom_call.1} parent=11 // pred_check
          %p380 = pneg %p215
        $region22: #{tpu_custom_call.1} parent=11 // pred_check_branch
          %382 = sbr.rel (%p380) target = $region24
        $region23: #{tpu_custom_call.1} parent=11 // pred_region
          %384 = vsyncadd [#allocation12], 0
          %s385 = sshll.u32 %s6, 4
          %s386 = int_to_ptr.hbm [resolvable:$true] %s385
          %s387 = sshll.u32 [#allocation11], 4
          %s388 = int_to_ptr.vmem [resolvable:$true] %s387
          %393 = dma.hbm_to_vmem [thread:$0]  %s386, 256, %s388, [#allocation12], 64, 64, 4
        $region24: #{tpu_custom_call.1} parent=11 // pred_fallthru
          _
        // Predicated region
        $region25: #{tpu_custom_call.1} parent=11 // pred_check
          %p394 = pneg %p236
        $region26: #{tpu_custom_call.1} parent=11 // pred_check_branch
          %396 = sbr.rel (%p394) target = $region28
        $region27: #{tpu_custom_call.1} parent=11 // pred_region
          _
        $region28: #{tpu_custom_call.1} parent=11 // pred_fallthru
          _
        // Predicated region
        $region29: #{tpu_custom_call.1} parent=11 // pred_check
          %p397 = pneg %p257
        $region30: #{tpu_custom_call.1} parent=11 // pred_check_branch
          %399 = sbr.rel (%p397) target = $region32
        $region31: #{tpu_custom_call.1} parent=11 // pred_region
          %401 = vsyncadd [#allocation12], 0
          %s402 = sshll.u32 %s8, 4
          %s403 = int_to_ptr.hbm [resolvable:$true] %s402
          %s404 = sshll.u32 [#allocation13], 4
          %s405 = int_to_ptr.vmem [resolvable:$true] %s404
          %410 = dma.hbm_to_vmem [thread:$0]  %s403, 256, %s405, [#allocation12], 64, 64, 4
        $region32: #{tpu_custom_call.1} parent=11 // pred_fallthru
          _
        // Predicated region
        $region33: #{tpu_custom_call.1} parent=11 // pred_check
          %p411 = pneg %p278
        $region34: #{tpu_custom_call.1} parent=11 // pred_check_branch
          %413 = sbr.rel (%p411) target = $region36
        $region35: #{tpu_custom_call.1} parent=11 // pred_region
          _
        $region36: #{tpu_custom_call.1} parent=11 // pred_fallthru
          _
        // Predicated region
        $region37: #{tpu_custom_call.1} parent=11 // pred_check
          %p414 = pneg %p299
        $region38: #{tpu_custom_call.1} parent=11 // pred_check_branch
          %416 = sbr.rel (%p414) target = $region40
        $region39: #{tpu_custom_call.1} parent=11 // pred_region
          %418 = vsyncadd [#allocation15], 0
          %s419 = sshll.u32 %s10, 4
          %s420 = int_to_ptr.hbm [resolvable:$true] %s419
          %s421 = sshll.u32 [#allocation14], 4
          %s422 = int_to_ptr.vmem [resolvable:$true] %s421
          %427 = dma.hbm_to_vmem [thread:$0]  %s420, 256, %s422, [#allocation15], 64, 64, 4
        $region40: #{tpu_custom_call.1} parent=11 // pred_fallthru
          _
        // Predicated region
        $region41: #{tpu_custom_call.1} parent=11 // pred_check
          %p428 = pneg %p320
        $region42: #{tpu_custom_call.1} parent=11 // pred_check_branch
          %430 = sbr.rel (%p428) target = $region44
        $region43: #{tpu_custom_call.1} parent=11 // pred_region
          _
        $region44: #{tpu_custom_call.1} parent=11 // pred_fallthru
          _
      $region12: #{tpu_custom_call.1} parent=5 // pred_fallthru
        _
      %p431 = scmp.lt.s32.totalorder %s32, 2
      // Predicated region
      $region45: #{tpu_custom_call.1} parent=5 // pred_check
        %p432 = pneg %p431
      $region46: #{tpu_custom_call.1} parent=5 // pred_check_branch
        %434 = sbr.rel (%p432) target = $region48
      $region47: #{tpu_custom_call.1} parent=5 // pred_region
        // Predicated region
        $region49: #{tpu_custom_call.1} parent=47 // pred_check
          %p435 = pneg %p66
        $region50: #{tpu_custom_call.1} parent=47 // pred_check_branch
          %437 = sbr.rel (%p435) target = $region52
        $region51: #{tpu_custom_call.1} parent=47 // pred_region
          %s438 = sand.u32 %s56, 1
          %s439 = scalar_lea.sflag [#allocation3], %s438
          %s440 = sand.u32 %s56, 1
          %s441 = smul.addr %s440, 8
          %s442 = scalar_lea.vmem [#allocation2], %s441
          %444 = vsyncadd %s439, 0
          %s445 = sadd.s32 %s40, %s39
          %s446 = smul.addr %s445, 8
          %s447 = scalar_lea.hbm %s0, %s446
          %s449 = sshll.u32 %s447, 4
          %s450 = int_to_ptr.hbm [resolvable:$true] %s449
          %s451 = sshll.u32 %s442, 4
          %s452 = int_to_ptr.vmem [resolvable:$true] %s451
          %454 = dma.hbm_to_vmem [thread:$0]  %s450, 128, %s452, %s439
        $region52: #{tpu_custom_call.1} parent=47 // pred_fallthru
          _
        // Predicated region
        $region53: #{tpu_custom_call.1} parent=47 // pred_check
          %p455 = pneg %p92
        $region54: #{tpu_custom_call.1} parent=47 // pred_check_branch
          %457 = sbr.rel (%p455) target = $region56
        $region55: #{tpu_custom_call.1} parent=47 // pred_region
          %s458 = sand.u32 %s32, 1
          %s459 = scalar_lea.sflag [#allocation6], %s458
          %s460 = sand.u32 %s82, 1
          %s461 = smul.addr %s460, 8
          %s462 = scalar_lea.vmem [#allocation5], %s461
          %464 = vsyncadd %s459, 0
          %s465 = smul.addr %s39, 8
          %s466 = scalar_lea.hbm %s1, %s465
          %s468 = sshll.u32 %s466, 4
          %s469 = int_to_ptr.hbm [resolvable:$true] %s468
          %s470 = sshll.u32 %s462, 4
          %s471 = int_to_ptr.vmem [resolvable:$true] %s470
          %473 = dma.hbm_to_vmem [thread:$0]  %s469, 128, %s471, %s459
        $region56: #{tpu_custom_call.1} parent=47 // pred_fallthru
          _
        // Predicated region
        $region57: #{tpu_custom_call.1} parent=47 // pred_check
          %p474 = pneg %p118
        $region58: #{tpu_custom_call.1} parent=47 // pred_check_branch
          %476 = sbr.rel (%p474) target = $region60
        $region59: #{tpu_custom_call.1} parent=47 // pred_region
          %s477 = sand.u32 %s32, 1
          %s478 = scalar_lea.sflag [#allocation6], %s477
          %s479 = sand.u32 %s108, 1
          %s480 = smul.addr %s479, 8
          %s481 = scalar_lea.vmem [#allocation7], %s480
          %483 = vsyncadd %s478, 0
          %s484 = smul.addr %s39, 8
          %s485 = scalar_lea.hbm %s2, %s484
          %s487 = sshll.u32 %s485, 4
          %s488 = int_to_ptr.hbm [resolvable:$true] %s487
          %s489 = sshll.u32 %s481, 4
          %s490 = int_to_ptr.vmem [resolvable:$true] %s489
          %492 = dma.hbm_to_vmem [thread:$0]  %s488, 128, %s490, %s478
        $region60: #{tpu_custom_call.1} parent=47 // pred_fallthru
          _
        // Predicated region
        $region61: #{tpu_custom_call.1} parent=47 // pred_check
          %p493 = pneg %p146
        $region62: #{tpu_custom_call.1} parent=47 // pred_check_branch
          %495 = sbr.rel (%p493) target = $region64
        $region63: #{tpu_custom_call.1} parent=47 // pred_region
          %s496 = sand.u32 %s32, 1
          %s497 = scalar_lea.sflag [#allocation9], %s496
          %s498 = sand.u32 %s136, 1
          %s499 = smul.addr %s498, 8
          %s500 = scalar_lea.vmem [#allocation8], %s499
          %502 = vsyncadd %s497, 0
          %s503 = sadd.s32 %s40, %s39
          %s504 = smul.addr %s503, 8
          %s505 = scalar_lea.hbm %s3, %s504
          %s507 = sshll.u32 %s505, 4
          %s508 = int_to_ptr.hbm [resolvable:$true] %s507
          %s509 = sshll.u32 %s500, 4
          %s510 = int_to_ptr.vmem [resolvable:$true] %s509
          %512 = dma.hbm_to_vmem [thread:$0]  %s508, 128, %s510, %s497
        $region64: #{tpu_custom_call.1} parent=47 // pred_fallthru
          _
      $region48: #{tpu_custom_call.1} parent=5 // pred_fallthru
        _
      %p513 = scmp.le.s32.totalorder 1, %s32
      %p514 = scmp.lt.s32.totalorder %s32, 3
      %p515 = pnand %p513, %p514
      %p516 = pneg %p515
      // Predicated region
      $region65: #{tpu_custom_call.1} parent=5 // pred_check
        _
      $region66: #{tpu_custom_call.1} parent=5 // pred_check_branch
        %518 = sbr.rel (%p515) target = $region68
      $region67: #{tpu_custom_call.1} parent=5 // pred_region
        %s519 = ssub.s32 %s32, 1
        %s520 = sand.u32 %s59, 1
        %s521 = scalar_lea.sflag [#allocation3], %s520
        %s522 = sand.u32 %s59, 1
        %s523 = smul.addr %s522, 8
        %s524 = scalar_lea.vmem [#allocation2], %s523
        // Predicated region
        $region69: #{tpu_custom_call.1} parent=67 // pred_check
          %p525 = pneg %p72
        $region70: #{tpu_custom_call.1} parent=67 // pred_check_branch
          %527 = sbr.rel (%p525) target = $region72
        $region71: #{tpu_custom_call.1} parent=67 // pred_region
          %529 = dma.done %s521, 128
        $region72: #{tpu_custom_call.1} parent=67 // pred_fallthru
          _
        %s530 = sand.u32 %s37, 1
        %s531 = scalar_lea.sflag [#allocation6], %s530
        %s532 = sand.u32 %s85, 1
        %s533 = smul.addr %s532, 8
        %s534 = scalar_lea.vmem [#allocation5], %s533
        // Predicated region
        $region73: #{tpu_custom_call.1} parent=67 // pred_check
          %p535 = pneg %p98
        $region74: #{tpu_custom_call.1} parent=67 // pred_check_branch
          %537 = sbr.rel (%p535) target = $region76
        $region75: #{tpu_custom_call.1} parent=67 // pred_region
          %539 = dma.done %s531, 128
        $region76: #{tpu_custom_call.1} parent=67 // pred_fallthru
          _
        %s540 = sand.u32 %s37, 1
        %s541 = scalar_lea.sflag [#allocation6], %s540
        %s542 = sand.u32 %s111, 1
        %s543 = smul.addr %s542, 8
        %s544 = scalar_lea.vmem [#allocation7], %s543
        // Predicated region
        $region77: #{tpu_custom_call.1} parent=67 // pred_check
          %p545 = pneg %p124
        $region78: #{tpu_custom_call.1} parent=67 // pred_check_branch
          %547 = sbr.rel (%p545) target = $region80
        $region79: #{tpu_custom_call.1} parent=67 // pred_region
          %549 = dma.done %s541, 128
        $region80: #{tpu_custom_call.1} parent=67 // pred_fallthru
          _
        %s550 = sand.u32 %s37, 1
        %s551 = scalar_lea.sflag [#allocation9], %s550
        %s552 = sand.u32 %s139, 1
        %s553 = smul.addr %s552, 8
        %s554 = scalar_lea.vmem [#allocation8], %s553
        // Predicated region
        $region81: #{tpu_custom_call.1} parent=67 // pred_check
          %p555 = pneg %p152
        $region82: #{tpu_custom_call.1} parent=67 // pred_check_branch
          %557 = sbr.rel (%p555) target = $region84
        $region83: #{tpu_custom_call.1} parent=67 // pred_region
          %559 = dma.done %s551, 128
        $region84: #{tpu_custom_call.1} parent=67 // pred_fallthru
          _
        // Predicated region
        $region85: #{tpu_custom_call.1} parent=67 // pred_check
          %p560 = pneg %p173
        $region86: #{tpu_custom_call.1} parent=67 // pred_check_branch
          %562 = sbr.rel (%p560) target = $region88
        $region87: #{tpu_custom_call.1} parent=67 // pred_region
          %564 = dma.done [#allocation9], 256
        $region88: #{tpu_custom_call.1} parent=67 // pred_fallthru
          _
        // Predicated region
        $region89: #{tpu_custom_call.1} parent=67 // pred_check
          %p565 = pneg %p215
        $region90: #{tpu_custom_call.1} parent=67 // pred_check_branch
          %567 = sbr.rel (%p565) target = $region92
        $region91: #{tpu_custom_call.1} parent=67 // pred_region
          %569 = dma.done [#allocation12], 256
        $region92: #{tpu_custom_call.1} parent=67 // pred_fallthru
          _
        // Predicated region
        $region93: #{tpu_custom_call.1} parent=67 // pred_check
          %p570 = pneg %p257
        $region94: #{tpu_custom_call.1} parent=67 // pred_check_branch
          %572 = sbr.rel (%p570) target = $region96
        $region95: #{tpu_custom_call.1} parent=67 // pred_region
          %574 = dma.done [#allocation12], 256
        $region96: #{tpu_custom_call.1} parent=67 // pred_fallthru
          _
        // Predicated region
        $region97: #{tpu_custom_call.1} parent=67 // pred_check
          %p575 = pneg %p299
        $region98: #{tpu_custom_call.1} parent=67 // pred_check_branch
          %577 = sbr.rel (%p575) target = $region100
        $region99: #{tpu_custom_call.1} parent=67 // pred_region
          %579 = dma.done [#allocation15], 256
        $region100: #{tpu_custom_call.1} parent=67 // pred_fallthru
          _
        %s580 = sand.u32 %s59, 1
        %s581 = scalar_lea.sflag [#allocation3], %s580
        %s582 = sand.u32 %s59, 1
        %s583 = smul.addr %s582, 8
        %s584 = scalar_lea.vmem [#allocation2], %s583
        %p585 = pneg %p72
        %p586 = pneg %p69
        %s587 = sand.u32 %s37, 1
        %s588 = scalar_lea.sflag [#allocation6], %s587
        %s589 = sand.u32 %s85, 1
        %s590 = smul.addr %s589, 8
        %s591 = scalar_lea.vmem [#allocation5], %s590
        %p592 = pneg %p98
        %p593 = pneg %p95
        %s594 = sand.u32 %s37, 1
        %s595 = scalar_lea.sflag [#allocation6], %s594
        %s596 = sand.u32 %s111, 1
        %s597 = smul.addr %s596, 8
        %s598 = scalar_lea.vmem [#allocation7], %s597
        %p599 = pneg %p124
        %p600 = pneg %p121
        %s601 = sand.u32 %s37, 1
        %s602 = scalar_lea.sflag [#allocation9], %s601
        %s603 = sand.u32 %s139, 1
        %s604 = smul.addr %s603, 8
        %s605 = scalar_lea.vmem [#allocation8], %s604
        %p606 = pneg %p152
        %p607 = pneg %p149
        %p608 = pneg %p173
        %p609 = pneg %p170
        %p610 = pneg %p194
        %p611 = pneg %p191
        %p612 = pneg %p215
        %p613 = pneg %p212
        %p614 = pneg %p236
        %p615 = pneg %p233
        %p616 = pneg %p257
        %p617 = pneg %p254
        %p618 = pneg %p278
        %p619 = pneg %p275
        %p620 = pneg %p299
        %p621 = pneg %p296
        %p622 = pneg %p320
        %p623 = pneg %p317
        %p624 = pneg %p348
        %p625 = pneg %p345
        %s626 = sand.u32 %s335, 1
        %s627 = scalar_lea.sflag [#allocation4], %s626
        %s628 = sand.u32 %s335, 1
        %s629 = smul.addr %s628, 8
        %s630 = scalar_lea.vmem [#allocation16], %s629
        %v632 = vld [vmem:[%s524] sm:$0xff]
        %v633 = vld [vmem:[%s534] sm:$0xff]
        %v634 = vld [vmem:[%s544] sm:$0xff]
        %v635 = vld [vmem:[%s554] sm:$0xff]
        %v636 = vpack.c.bf16 %v632, %v632
        %v637 = vld [vmem:[#allocation10] sm:$0xf]
        %v638 = vld [vmem:[#allocation10 + $0x4] sm:$0xf]
        %v639 = vld [vmem:[#allocation10 + $0x8] sm:$0xf]
        %v640 = vld [vmem:[#allocation10 + $0xc] sm:$0xf]
        %v641 = vld [vmem:[%s5] sm:$0x1]
        %v643 = vperm.slane %v641, 0
        %v649 = vunpack.c.l.b16 %v637
        %v650 = vunpack.c.l.b16 %v638
        %v651 = vunpack.c.l.b16 %v639
        %v652 = vunpack.c.l.b16 %v640
        %v653 = vpack.c.b16 %v650, %v649
        %v654 = vpack.c.b16 %v652, %v651
        %vm657 = vcmask 261120
        %v659 = vsel %vm657, %v636, 0
        %661 = vmatpush.bf16.msra.mxu0 0
        %662 = vmatpush.bf16.msra.mxu0 0
        %663 = vmatpush.bf16.msra.mxu0 0
        %664 = vmatpush.bf16.msra.mxu0 0
        %665 = vmatpush.bf16.msra.mxu0 0
        %666 = vmatpush.bf16.msra.mxu0 0
        %667 = vmatpush.bf16.msra.mxu0 %v654
        %668 = vmatpush.bf16.msra.mxu0 %v653
        %669 = vmatmul.bf16.gmra.mxu0 %v659
        %v670 = vpop.f32.mrf.mxu0
        %v671 = vadd.f32 %v643, %v670
        %v672 = vpop.f32.mrf.mxu0
        %673 = vdwg.mxu0
        %v674 = vpack.c.bf16 %v633, %v633
        %v675 = vld [vmem:[#allocation11] sm:$0xf]
        %v676 = vld [vmem:[#allocation11 + $0x4] sm:$0xf]
        %v677 = vld [vmem:[#allocation11 + $0x8] sm:$0xf]
        %v678 = vld [vmem:[#allocation11 + $0xc] sm:$0xf]
        %v679 = vld [vmem:[%s7] sm:$0x1]
        %v681 = vperm.slane %v679, 0
        %v687 = vunpack.c.l.b16 %v675
        %v688 = vunpack.c.l.b16 %v676
        %v689 = vunpack.c.l.b16 %v677
        %v690 = vunpack.c.l.b16 %v678
        %v691 = vpack.c.b16 %v688, %v687
        %v692 = vpack.c.b16 %v690, %v689
        %v696 = vsel %vm657, %v674, 0
        %698 = vmatpush.bf16.msra.mxu0 0
        %699 = vmatpush.bf16.msra.mxu0 0
        %700 = vmatpush.bf16.msra.mxu0 0
        %701 = vmatpush.bf16.msra.mxu0 0
        %702 = vmatpush.bf16.msra.mxu0 0
        %703 = vmatpush.bf16.msra.mxu0 0
        %704 = vmatpush.bf16.msra.mxu0 %v692
        %705 = vmatpush.bf16.msra.mxu0 %v691
        %706 = vmatmul.bf16.gmra.mxu0 %v696
        %v707 = vpop.f32.mrf.mxu0
        %v708 = vadd.f32 %v681, %v707
        %v709 = vpop.f32.mrf.mxu0
        %710 = vdwg.mxu0
        %v711 = vpack.c.bf16 %v634, %v634
        %v712 = vld [vmem:[#allocation13] sm:$0xf]
        %v713 = vld [vmem:[#allocation13 + $0x4] sm:$0xf]
        %v714 = vld [vmem:[#allocation13 + $0x8] sm:$0xf]
        %v715 = vld [vmem:[#allocation13 + $0xc] sm:$0xf]
        %v716 = vld [vmem:[%s9] sm:$0x1]
        %v718 = vperm.slane %v716, 0
        %v724 = vunpack.c.l.b16 %v712
        %v725 = vunpack.c.l.b16 %v713
        %v726 = vunpack.c.l.b16 %v714
        %v727 = vunpack.c.l.b16 %v715
        %v728 = vpack.c.b16 %v725, %v724
        %v729 = vpack.c.b16 %v727, %v726
        %v733 = vsel %vm657, %v711, 0
        %735 = vmatpush.bf16.msra.mxu0 0
        %736 = vmatpush.bf16.msra.mxu0 0
        %737 = vmatpush.bf16.msra.mxu0 0
        %738 = vmatpush.bf16.msra.mxu0 0
        %739 = vmatpush.bf16.msra.mxu0 0
        %740 = vmatpush.bf16.msra.mxu0 0
        %741 = vmatpush.bf16.msra.mxu0 %v729
        %742 = vmatpush.bf16.msra.mxu0 %v728
        %743 = vmatmul.bf16.gmra.mxu0 %v733
        %v744 = vpop.f32.mrf.mxu0
        %v745 = vadd.f32 %v718, %v744
        %v746 = vpop.f32.mrf.mxu0
        %747 = vdwg.mxu0
        %v748 = vmul.f32 %v671, 0.35355338
        %750 = vrot.lane.b32.xlu0 %v748, 120
        %v751 = vpop.permute.xlu0 %750
        %753 = vrot.lane.b32.xlu0 %v748, 112
        %v754 = vpop.permute.xlu0 %753
        %756 = vrot.lane.b32.xlu0 %v748, 104
        %v757 = vpop.permute.xlu0 %756
        %v759 = vrot.slane %v754, 4
        %vm760 = vcmask 1047556
        %v761 = vsel %vm760, %v759, %v748
        %v762 = vrot.slane %v748, 4
        %v763 = vsel %vm760, %v754, %v762
        %v765 = vunpack.c.l.s4 1983009808
        %v766 = vunpack.c.0.s8 %v765
        %v767 = vperm.slane %v761, %v766
        %v769 = vunpack.c.l.s4 1983009808
        %v770 = vunpack.c.0.s8 %v769
        %v771 = vperm.slane %v763, %v770
        %v772 = vrot.slane %v757, 4
        %v773 = vsel %vm760, %v772, %v751
        %v774 = vrot.slane %v751, 4
        %v775 = vsel %vm760, %v757, %v774
        %v777 = vunpack.c.l.s4 1983009808
        %v778 = vunpack.c.0.s8 %v777
        %v779 = vperm.slane %v773, %v778
        %v781 = vunpack.c.l.s4 1983009808
        %v782 = vunpack.c.0.s8 %v781
        %v783 = vperm.slane %v775, %v782
        %v784 = vrot.slane %v779, 4
        %v785 = vsel %vm760, %v784, %v767
        %v786 = vrot.slane %v767, 4
        %v787 = vsel %vm760, %v779, %v786
        %v789 = vunpack.c.l.s4 1934713408
        %v790 = vunpack.c.0.s8 %v789
        %v791 = vperm.slane %v785, %v790
        %v793 = vunpack.c.l.s4 1934713408
        %v794 = vunpack.c.0.s8 %v793
        %v795 = vperm.slane %v787, %v794
        %v796 = vrot.slane %v783, 4
        %v797 = vsel %vm760, %v796, %v771
        %v798 = vrot.slane %v771, 4
        %v799 = vsel %vm760, %v783, %v798
        %v801 = vunpack.c.l.s4 1934713408
        %v802 = vunpack.c.0.s8 %v801
        %v803 = vperm.slane %v797, %v802
        %v805 = vunpack.c.l.s4 1934713408
        %v806 = vunpack.c.0.s8 %v805
        %v807 = vperm.slane %v799, %v806
        %v808 = vrot.slane %v791, 4
        %v809 = vsel %vm760, 0.0, %v808
        %v810 = vrot.slane %v795, 4
        %v811 = vsel %vm760, 0.0, %v810
        %v812 = vrot.slane %v803, 4
        %v813 = vsel %vm760, 0.0, %v812
        %v814 = vrot.slane %v807, 4
        %v815 = vsel %vm760, 0.0, %v814
        %v816 = vpack.c.bf16 %v791, %v791
        %v817 = vpack.c.bf16 %v809, %v809
        %v818 = vpack.c.bf16 %v795, %v795
        %v819 = vpack.c.bf16 %v811, %v811
        %v820 = vpack.c.bf16 %v803, %v803
        %v821 = vpack.c.bf16 %v813, %v813
        %v822 = vpack.c.bf16 %v807, %v807
        %v823 = vpack.c.bf16 %v815, %v815
        %825 = vrot.lane.b32.xlu0 %v708, 120
        %v826 = vpop.permute.xlu0 %825
        %828 = vrot.lane.b32.xlu0 %v708, 112
        %v829 = vpop.permute.xlu0 %828
        %831 = vrot.lane.b32.xlu0 %v708, 104
        %v832 = vpop.permute.xlu0 %831
        %v834 = vrot.slane %v829, 4
        %v835 = vsel %vm760, %v834, %v708
        %v836 = vrot.slane %v708, 4
        %v837 = vsel %vm760, %v829, %v836
        %v839 = vunpack.c.l.s4 1983009808
        %v840 = vunpack.c.0.s8 %v839
        %v841 = vperm.slane %v835, %v840
        %v843 = vunpack.c.l.s4 1983009808
        %v844 = vunpack.c.0.s8 %v843
        %v845 = vperm.slane %v837, %v844
        %v846 = vrot.slane %v832, 4
        %v847 = vsel %vm760, %v846, %v826
        %v848 = vrot.slane %v826, 4
        %v849 = vsel %vm760, %v832, %v848
        %v851 = vunpack.c.l.s4 1983009808
        %v852 = vunpack.c.0.s8 %v851
        %v853 = vperm.slane %v847, %v852
        %v855 = vunpack.c.l.s4 1983009808
        %v856 = vunpack.c.0.s8 %v855
        %v857 = vperm.slane %v849, %v856
        %v858 = vrot.slane %v853, 4
        %v859 = vsel %vm760, %v858, %v841
        %v860 = vrot.slane %v841, 4
        %v861 = vsel %vm760, %v853, %v860
        %v863 = vunpack.c.l.s4 1934713408
        %v864 = vunpack.c.0.s8 %v863
        %v865 = vperm.slane %v859, %v864
        %v867 = vunpack.c.l.s4 1934713408
        %v868 = vunpack.c.0.s8 %v867
        %v869 = vperm.slane %v861, %v868
        %v870 = vrot.slane %v857, 4
        %v871 = vsel %vm760, %v870, %v845
        %v872 = vrot.slane %v845, 4
        %v873 = vsel %vm760, %v857, %v872
        %v875 = vunpack.c.l.s4 1934713408
        %v876 = vunpack.c.0.s8 %v875
        %v877 = vperm.slane %v871, %v876
        %v879 = vunpack.c.l.s4 1934713408
        %v880 = vunpack.c.0.s8 %v879
        %v881 = vperm.slane %v873, %v880
        %v882 = vrot.slane %v865, 4
        %v883 = vsel %vm760, 0.0, %v882
        %v884 = vrot.slane %v869, 4
        %v885 = vsel %vm760, 0.0, %v884
        %v886 = vrot.slane %v877, 4
        %v887 = vsel %vm760, 0.0, %v886
        %v888 = vrot.slane %v881, 4
        %v889 = vsel %vm760, 0.0, %v888
        %v890 = vpack.c.bf16 %v865, %v865
        %v891 = vpack.c.bf16 %v883, %v883
        %v892 = vpack.c.bf16 %v869, %v869
        %v893 = vpack.c.bf16 %v885, %v885
        %v894 = vpack.c.bf16 %v877, %v877
        %v895 = vpack.c.bf16 %v887, %v887
        %v896 = vpack.c.bf16 %v881, %v881
        %v897 = vpack.c.bf16 %v889, %v889
        %899 = vrot.lane.b32.xlu0 %v745, 120
        %v900 = vpop.permute.xlu0 %899
        %902 = vrot.lane.b32.xlu0 %v745, 112
        %v903 = vpop.permute.xlu0 %902
        %905 = vrot.lane.b32.xlu0 %v745, 104
        %v906 = vpop.permute.xlu0 %905
        %v908 = vrot.slane %v903, 4
        %v909 = vsel %vm760, %v908, %v745
        %v910 = vrot.slane %v745, 4
        %v911 = vsel %vm760, %v903, %v910
        %v913 = vunpack.c.l.s4 1983009808
        %v914 = vunpack.c.0.s8 %v913
        %v915 = vperm.slane %v909, %v914
        %v917 = vunpack.c.l.s4 1983009808
        %v918 = vunpack.c.0.s8 %v917
        %v919 = vperm.slane %v911, %v918
        %v920 = vrot.slane %v906, 4
        %v921 = vsel %vm760, %v920, %v900
        %v922 = vrot.slane %v900, 4
        %v923 = vsel %vm760, %v906, %v922
        %v925 = vunpack.c.l.s4 1983009808
        %v926 = vunpack.c.0.s8 %v925
        %v927 = vperm.slane %v921, %v926
        %v929 = vunpack.c.l.s4 1983009808
        %v930 = vunpack.c.0.s8 %v929
        %v931 = vperm.slane %v923, %v930
        %v932 = vrot.slane %v927, 4
        %v933 = vsel %vm760, %v932, %v915
        %v934 = vrot.slane %v915, 4
        %v935 = vsel %vm760, %v927, %v934
        %v937 = vunpack.c.l.s4 1934713408
        %v938 = vunpack.c.0.s8 %v937
        %v939 = vperm.slane %v933, %v938
        %v941 = vunpack.c.l.s4 1934713408
        %v942 = vunpack.c.0.s8 %v941
        %v943 = vperm.slane %v935, %v942
        %v944 = vrot.slane %v931, 4
        %v945 = vsel %vm760, %v944, %v919
        %v946 = vrot.slane %v919, 4
        %v947 = vsel %vm760, %v931, %v946
        %v949 = vunpack.c.l.s4 1934713408
        %v950 = vunpack.c.0.s8 %v949
        %v951 = vperm.slane %v945, %v950
        %v953 = vunpack.c.l.s4 1934713408
        %v954 = vunpack.c.0.s8 %v953
        %v955 = vperm.slane %v947, %v954
        %v956 = vrot.slane %v939, 4
        %v957 = vsel %vm760, 0.0, %v956
        %v958 = vrot.slane %v943, 4
        %v959 = vsel %vm760, 0.0, %v958
        %v960 = vrot.slane %v951, 4
        %v961 = vsel %vm760, 0.0, %v960
        %v962 = vrot.slane %v955, 4
        %v963 = vsel %vm760, 0.0, %v962
        %v964 = vpack.c.bf16 %v939, %v939
        %v965 = vpack.c.bf16 %v957, %v957
        %v966 = vpack.c.bf16 %v943, %v943
        %v967 = vpack.c.bf16 %v959, %v959
        %v968 = vpack.c.bf16 %v951, %v951
        %v969 = vpack.c.bf16 %v961, %v961
        %v970 = vpack.c.bf16 %v955, %v955
        %v971 = vpack.c.bf16 %v963, %v963
        %v972 = vsub.f32 %v635, 1.0
        %v973 = vmul.f32 %v972, 1e+09
        %v974 = vrot.slane %v820, 4
        %vm975 = vcmask 1047556
        %v976 = vsel %vm975, %v974, %v816
        %v978 = vunpack.c.l.s4 1983009808
        %v979 = vunpack.c.0.s8 %v978
        %v980 = vperm.slane %v976, %v979
        %v981 = vrot.slane %v822, 4
        %v982 = vsel %vm975, %v981, %v818
        %v984 = vunpack.c.l.s4 1983009808
        %v985 = vunpack.c.0.s8 %v984
        %v986 = vperm.slane %v982, %v985
        %v987 = vrot.slane %v986, 4
        %v988 = vsel %vm975, %v987, %v980
        %v990 = vunpack.c.l.s4 1934713408
        %v991 = vunpack.c.0.s8 %v990
        %v992 = vperm.slane %v988, %v991
        %v993 = vrot.slane %v992, 4
        %v994 = vsel %vm975, 0, %v993
        %v995 = vrot.slane %v821, 4
        %v996 = vsel %vm975, %v995, %v817
        %v998 = vunpack.c.l.s4 1983009808
        %v999 = vunpack.c.0.s8 %v998
        %v1000 = vperm.slane %v996, %v999
        %v1001 = vrot.slane %v823, 4
        %v1002 = vsel %vm975, %v1001, %v819
        %v1004 = vunpack.c.l.s4 1983009808
        %v1005 = vunpack.c.0.s8 %v1004
        %v1006 = vperm.slane %v1002, %v1005
        %v1007 = vrot.slane %v1006, 4
        %v1008 = vsel %vm975, %v1007, %v1000
        %v1010 = vunpack.c.l.s4 1934713408
        %v1011 = vunpack.c.0.s8 %v1010
        %v1012 = vperm.slane %v1008, %v1011
        %v1013 = vrot.slane %v1012, 4
        %v1014 = vsel %vm975, 0, %v1013
        %v1017 = vpack.i.b16 %v1012, %v992
        %v1018 = vshrl.u32 %v992, 16
        %v1019 = vshrl.u32 %v1012, 16
        %v1020 = vpack.i.b16 %v1019, %v1018
        %v1023 = vpack.i.b16 %v1014, %v994
        %v1024 = vshrl.u32 %v994, 16
        %v1025 = vshrl.u32 %v1014, 16
        %v1026 = vpack.i.b16 %v1025, %v1024
        %1027 = vxpose.xlu0.c.b16.start [1/8] %v890, 128
        %1028 = vxpose.xlu0.c.b16.cont [2/8] 0, 128
        %1029 = vxpose.xlu0.c.b16.cont [3/8] 0, 128
        %1030 = vxpose.xlu0.c.b16.cont [4/8] 0, 128
        %1031 = vxpose.xlu0.c.b16.cont [5/8] 0, 128
        %1032 = vxpose.xlu0.c.b16.cont [6/8] 0, 128
        %1033 = vxpose.xlu0.c.b16.cont [7/8] 0, 128
        %1034 = vxpose.xlu0.c.b16.end [8/8] 0, 128
        %v1035 = vpop.trf.xlu0
        %v1036 = vpop.trf.xlu0
        %v1037 = vpop.trf.xlu0
        %v1038 = vpop.trf.xlu0
        %v1039 = vpop.trf.xlu0
        %v1040 = vpop.trf.xlu0
        %v1041 = vpop.trf.xlu0
        %v1042 = vpop.trf.xlu0
        %1043 = vxpose.xlu0.c.b16.start [1/8] %v891, 128
        %1044 = vxpose.xlu0.c.b16.cont [2/8] 0, 128
        %1045 = vxpose.xlu0.c.b16.cont [3/8] 0, 128
        %1046 = vxpose.xlu0.c.b16.cont [4/8] 0, 128
        %1047 = vxpose.xlu0.c.b16.cont [5/8] 0, 128
        %1048 = vxpose.xlu0.c.b16.cont [6/8] 0, 128
        %1049 = vxpose.xlu0.c.b16.cont [7/8] 0, 128
        %1050 = vxpose.xlu0.c.b16.end [8/8] 0, 128
        %v1051 = vpop.trf.xlu0
        %v1052 = vpop.trf.xlu0
        %v1053 = vpop.trf.xlu0
        %v1054 = vpop.trf.xlu0
        %v1055 = vpop.trf.xlu0
        %v1056 = vpop.trf.xlu0
        %v1057 = vpop.trf.xlu0
        %v1058 = vpop.trf.xlu0
        %1059 = vxpose.xlu0.c.b16.start [1/8] %v892, 128
        %1060 = vxpose.xlu0.c.b16.cont [2/8] 0, 128
        %1061 = vxpose.xlu0.c.b16.cont [3/8] 0, 128
        %1062 = vxpose.xlu0.c.b16.cont [4/8] 0, 128
        %1063 = vxpose.xlu0.c.b16.cont [5/8] 0, 128
        %1064 = vxpose.xlu0.c.b16.cont [6/8] 0, 128
        %1065 = vxpose.xlu0.c.b16.cont [7/8] 0, 128
        %1066 = vxpose.xlu0.c.b16.end [8/8] 0, 128
        %v1067 = vpop.trf.xlu0
        %v1068 = vpop.trf.xlu0
        %v1069 = vpop.trf.xlu0
        %v1070 = vpop.trf.xlu0
        %v1071 = vpop.trf.xlu0
        %v1072 = vpop.trf.xlu0
        %v1073 = vpop.trf.xlu0
        %v1074 = vpop.trf.xlu0
        %1075 = vxpose.xlu0.c.b16.start [1/8] %v893, 128
        %1076 = vxpose.xlu0.c.b16.cont [2/8] 0, 128
        %1077 = vxpose.xlu0.c.b16.cont [3/8] 0, 128
        %1078 = vxpose.xlu0.c.b16.cont [4/8] 0, 128
        %1079 = vxpose.xlu0.c.b16.cont [5/8] 0, 128
        %1080 = vxpose.xlu0.c.b16.cont [6/8] 0, 128
        %1081 = vxpose.xlu0.c.b16.cont [7/8] 0, 128
        %1082 = vxpose.xlu0.c.b16.end [8/8] 0, 128
        %v1083 = vpop.trf.xlu0
        %v1084 = vpop.trf.xlu0
        %v1085 = vpop.trf.xlu0
        %v1086 = vpop.trf.xlu0
        %v1087 = vpop.trf.xlu0
        %v1088 = vpop.trf.xlu0
        %v1089 = vpop.trf.xlu0
        %v1090 = vpop.trf.xlu0
        %1091 = vxpose.xlu0.c.b16.start [1/8] %v894, 128
        %1092 = vxpose.xlu0.c.b16.cont [2/8] 0, 128
        %1093 = vxpose.xlu0.c.b16.cont [3/8] 0, 128
        %1094 = vxpose.xlu0.c.b16.cont [4/8] 0, 128
        %1095 = vxpose.xlu0.c.b16.cont [5/8] 0, 128
        %1096 = vxpose.xlu0.c.b16.cont [6/8] 0, 128
        %1097 = vxpose.xlu0.c.b16.cont [7/8] 0, 128
        %1098 = vxpose.xlu0.c.b16.end [8/8] 0, 128
        %v1099 = vpop.trf.xlu0
        %v1100 = vpop.trf.xlu0
        %v1101 = vpop.trf.xlu0
        %v1102 = vpop.trf.xlu0
        %v1103 = vpop.trf.xlu0
        %v1104 = vpop.trf.xlu0
        %v1105 = vpop.trf.xlu0
        %v1106 = vpop.trf.xlu0
        %1107 = vxpose.xlu0.c.b16.start [1/8] %v895, 128
        %1108 = vxpose.xlu0.c.b16.cont [2/8] 0, 128
        %1109 = vxpose.xlu0.c.b16.cont [3/8] 0, 128
        %1110 = vxpose.xlu0.c.b16.cont [4/8] 0, 128
        %1111 = vxpose.xlu0.c.b16.cont [5/8] 0, 128
        %1112 = vxpose.xlu0.c.b16.cont [6/8] 0, 128
        %1113 = vxpose.xlu0.c.b16.cont [7/8] 0, 128
        %1114 = vxpose.xlu0.c.b16.end [8/8] 0, 128
        %v1115 = vpop.trf.xlu0
        %v1116 = vpop.trf.xlu0
        %v1117 = vpop.trf.xlu0
        %v1118 = vpop.trf.xlu0
        %v1119 = vpop.trf.xlu0
        %v1120 = vpop.trf.xlu0
        %v1121 = vpop.trf.xlu0
        %v1122 = vpop.trf.xlu0
        %1123 = vxpose.xlu0.c.b16.start [1/8] %v896, 128
        %1124 = vxpose.xlu0.c.b16.cont [2/8] 0, 128
        %1125 = vxpose.xlu0.c.b16.cont [3/8] 0, 128
        %1126 = vxpose.xlu0.c.b16.cont [4/8] 0, 128
        %1127 = vxpose.xlu0.c.b16.cont [5/8] 0, 128
        %1128 = vxpose.xlu0.c.b16.cont [6/8] 0, 128
        %1129 = vxpose.xlu0.c.b16.cont [7/8] 0, 128
        %1130 = vxpose.xlu0.c.b16.end [8/8] 0, 128
        %v1131 = vpop.trf.xlu0
        %v1132 = vpop.trf.xlu0
        %v1133 = vpop.trf.xlu0
        %v1134 = vpop.trf.xlu0
        %v1135 = vpop.trf.xlu0
        %v1136 = vpop.trf.xlu0
        %v1137 = vpop.trf.xlu0
        %v1138 = vpop.trf.xlu0
        %1139 = vxpose.xlu0.c.b16.start [1/8] %v897, 128
        %1140 = vxpose.xlu0.c.b16.cont [2/8] 0, 128
        %1141 = vxpose.xlu0.c.b16.cont [3/8] 0, 128
        %1142 = vxpose.xlu0.c.b16.cont [4/8] 0, 128
        %1143 = vxpose.xlu0.c.b16.cont [5/8] 0, 128
        %1144 = vxpose.xlu0.c.b16.cont [6/8] 0, 128
        %1145 = vxpose.xlu0.c.b16.cont [7/8] 0, 128
        %1146 = vxpose.xlu0.c.b16.end [8/8] 0, 128
        %v1147 = vpop.trf.xlu0
        %v1148 = vpop.trf.xlu0
        %v1149 = vpop.trf.xlu0
        %v1150 = vpop.trf.xlu0
        %v1151 = vpop.trf.xlu0
        %v1152 = vpop.trf.xlu0
        %v1153 = vpop.trf.xlu0
        %v1154 = vpop.trf.xlu0
        %v1155 = vrot.slane %v1099, 4
        %v1156 = vsel %vm975, %v1155, %v1035
        %v1158 = vunpack.c.l.s4 1983009808
        %v1159 = vunpack.c.0.s8 %v1158
        %v1160 = vperm.slane %v1156, %v1159
        %v1161 = vrot.slane %v1131, 4
        %v1162 = vsel %vm975, %v1161, %v1067
        %v1164 = vunpack.c.l.s4 1983009808
        %v1165 = vunpack.c.0.s8 %v1164
        %v1166 = vperm.slane %v1162, %v1165
        %v1167 = vrot.slane %v1166, 4
        %v1168 = vsel %vm975, %v1167, %v1160
        %v1169 = vrot.slane %v1160, 4
        %v1170 = vsel %vm975, %v1166, %v1169
        %v1172 = vunpack.c.l.s4 1934713408
        %v1173 = vunpack.c.0.s8 %v1172
        %v1174 = vperm.slane %v1168, %v1173
        %v1176 = vunpack.c.l.s4 1934713408
        %v1177 = vunpack.c.0.s8 %v1176
        %v1178 = vperm.slane %v1170, %v1177
        %v1179 = vrot.slane %v1174, 4
        %v1180 = vsel %vm975, 0, %v1179
        %v1181 = vrot.slane %v1178, 4
        %v1182 = vsel %vm975, 0, %v1181
        %v1183 = vrot.slane %v1115, 4
        %v1184 = vsel %vm975, %v1183, %v1051
        %v1186 = vunpack.c.l.s4 1983009808
        %v1187 = vunpack.c.0.s8 %v1186
        %v1188 = vperm.slane %v1184, %v1187
        %v1189 = vrot.slane %v1147, 4
        %v1190 = vsel %vm975, %v1189, %v1083
        %v1192 = vunpack.c.l.s4 1983009808
        %v1193 = vunpack.c.0.s8 %v1192
        %v1194 = vperm.slane %v1190, %v1193
        %v1195 = vrot.slane %v1194, 4
        %v1196 = vsel %vm975, %v1195, %v1188
        %v1197 = vrot.slane %v1188, 4
        %v1198 = vsel %vm975, %v1194, %v1197
        %v1200 = vunpack.c.l.s4 1934713408
        %v1201 = vunpack.c.0.s8 %v1200
        %v1202 = vperm.slane %v1196, %v1201
        %v1204 = vunpack.c.l.s4 1934713408
        %v1205 = vunpack.c.0.s8 %v1204
        %v1206 = vperm.slane %v1198, %v1205
        %v1207 = vrot.slane %v1202, 4
        %v1208 = vsel %vm975, 0, %v1207
        %v1209 = vrot.slane %v1206, 4
        %v1210 = vsel %vm975, 0, %v1209
        %v1213 = vpack.i.b16 %v1202, %v1174
        %v1215 = vshrl.u32 %v1174, 16
        %v1216 = vshrl.u32 %v1202, 16
        %v1217 = vpack.i.b16 %v1216, %v1215
        %v1221 = vpack.i.b16 %v1208, %v1180
        %v1223 = vshrl.u32 %v1180, 16
        %v1224 = vshrl.u32 %v1208, 16
        %v1225 = vpack.i.b16 %v1224, %v1223
        %v1229 = vpack.i.b16 %v1206, %v1178
        %v1231 = vshrl.u32 %v1178, 16
        %v1232 = vshrl.u32 %v1206, 16
        %v1233 = vpack.i.b16 %v1232, %v1231
        %v1237 = vpack.i.b16 %v1210, %v1182
        %v1239 = vshrl.u32 %v1182, 16
        %v1240 = vshrl.u32 %v1210, 16
        %v1241 = vpack.i.b16 %v1240, %v1239
        %1243 = vxpose.xlu0.c.b16.start [1/8] %v1213, 128
        %1244 = vxpose.xlu0.c.b16.cont [2/8] 0, 128
        %1245 = vxpose.xlu0.c.b16.cont [3/8] 0, 128
        %1246 = vxpose.xlu0.c.b16.cont [4/8] 0, 128
        %1247 = vxpose.xlu0.c.b16.cont [5/8] 0, 128
        %1248 = vxpose.xlu0.c.b16.cont [6/8] 0, 128
        %1249 = vxpose.xlu0.c.b16.cont [7/8] 0, 128
        %1250 = vxpose.xlu0.c.b16.end [8/8] 0, 128
        %v1251 = vpop.trf.xlu0
        %v1252 = vpop.trf.xlu0
        %v1253 = vpop.trf.xlu0
        %v1254 = vpop.trf.xlu0
        %v1255 = vpop.trf.xlu0
        %v1256 = vpop.trf.xlu0
        %v1257 = vpop.trf.xlu0
        %v1258 = vpop.trf.xlu0
        %1259 = vxpose.xlu0.c.b16.start [1/8] %v1217, 128
        %1260 = vxpose.xlu0.c.b16.cont [2/8] 0, 128
        %1261 = vxpose.xlu0.c.b16.cont [3/8] 0, 128
        %1262 = vxpose.xlu0.c.b16.cont [4/8] 0, 128
        %1263 = vxpose.xlu0.c.b16.cont [5/8] 0, 128
        %1264 = vxpose.xlu0.c.b16.cont [6/8] 0, 128
        %1265 = vxpose.xlu0.c.b16.cont [7/8] 0, 128
        %1266 = vxpose.xlu0.c.b16.end [8/8] 0, 128
        %v1267 = vpop.trf.xlu0
        %v1268 = vpop.trf.xlu0
        %v1269 = vpop.trf.xlu0
        %v1270 = vpop.trf.xlu0
        %v1271 = vpop.trf.xlu0
        %v1272 = vpop.trf.xlu0
        %v1273 = vpop.trf.xlu0
        %v1274 = vpop.trf.xlu0
        %1275 = vxpose.xlu0.c.b16.start [1/8] %v1221, 128
        %1276 = vxpose.xlu0.c.b16.cont [2/8] 0, 128
        %1277 = vxpose.xlu0.c.b16.cont [3/8] 0, 128
        %1278 = vxpose.xlu0.c.b16.cont [4/8] 0, 128
        %1279 = vxpose.xlu0.c.b16.cont [5/8] 0, 128
        %1280 = vxpose.xlu0.c.b16.cont [6/8] 0, 128
        %1281 = vxpose.xlu0.c.b16.cont [7/8] 0, 128
        %1282 = vxpose.xlu0.c.b16.end [8/8] 0, 128
        %v1283 = vpop.trf.xlu0
        %v1284 = vpop.trf.xlu0
        %v1285 = vpop.trf.xlu0
        %v1286 = vpop.trf.xlu0
        %v1287 = vpop.trf.xlu0
        %v1288 = vpop.trf.xlu0
        %v1289 = vpop.trf.xlu0
        %v1290 = vpop.trf.xlu0
        %1291 = vxpose.xlu0.c.b16.start [1/8] %v1225, 128
        %1292 = vxpose.xlu0.c.b16.cont [2/8] 0, 128
        %1293 = vxpose.xlu0.c.b16.cont [3/8] 0, 128
        %1294 = vxpose.xlu0.c.b16.cont [4/8] 0, 128
        %1295 = vxpose.xlu0.c.b16.cont [5/8] 0, 128
        %1296 = vxpose.xlu0.c.b16.cont [6/8] 0, 128
        %1297 = vxpose.xlu0.c.b16.cont [7/8] 0, 128
        %1298 = vxpose.xlu0.c.b16.end [8/8] 0, 128
        %v1299 = vpop.trf.xlu0
        %v1300 = vpop.trf.xlu0
        %v1301 = vpop.trf.xlu0
        %v1302 = vpop.trf.xlu0
        %v1303 = vpop.trf.xlu0
        %v1304 = vpop.trf.xlu0
        %v1305 = vpop.trf.xlu0
        %v1306 = vpop.trf.xlu0
        %1307 = vxpose.xlu0.c.b16.start [1/8] %v1229, 128
        %1308 = vxpose.xlu0.c.b16.cont [2/8] 0, 128
        %1309 = vxpose.xlu0.c.b16.cont [3/8] 0, 128
        %1310 = vxpose.xlu0.c.b16.cont [4/8] 0, 128
        %1311 = vxpose.xlu0.c.b16.cont [5/8] 0, 128
        %1312 = vxpose.xlu0.c.b16.cont [6/8] 0, 128
        %1313 = vxpose.xlu0.c.b16.cont [7/8] 0, 128
        %1314 = vxpose.xlu0.c.b16.end [8/8] 0, 128
        %v1315 = vpop.trf.xlu0
        %v1316 = vpop.trf.xlu0
        %v1317 = vpop.trf.xlu0
        %v1318 = vpop.trf.xlu0
        %v1319 = vpop.trf.xlu0
        %v1320 = vpop.trf.xlu0
        %v1321 = vpop.trf.xlu0
        %v1322 = vpop.trf.xlu0
        %1323 = vxpose.xlu0.c.b16.start [1/8] %v1233, 128
        %1324 = vxpose.xlu0.c.b16.cont [2/8] 0, 128
        %1325 = vxpose.xlu0.c.b16.cont [3/8] 0, 128
        %1326 = vxpose.xlu0.c.b16.cont [4/8] 0, 128
        %1327 = vxpose.xlu0.c.b16.cont [5/8] 0, 128
        %1328 = vxpose.xlu0.c.b16.cont [6/8] 0, 128
        %1329 = vxpose.xlu0.c.b16.cont [7/8] 0, 128
        %1330 = vxpose.xlu0.c.b16.end [8/8] 0, 128
        %v1331 = vpop.trf.xlu0
        %v1332 = vpop.trf.xlu0
        %v1333 = vpop.trf.xlu0
        %v1334 = vpop.trf.xlu0
        %v1335 = vpop.trf.xlu0
        %v1336 = vpop.trf.xlu0
        %v1337 = vpop.trf.xlu0
        %v1338 = vpop.trf.xlu0
        %1339 = vxpose.xlu0.c.b16.start [1/8] %v1237, 128
        %1340 = vxpose.xlu0.c.b16.cont [2/8] 0, 128
        %1341 = vxpose.xlu0.c.b16.cont [3/8] 0, 128
        %1342 = vxpose.xlu0.c.b16.cont [4/8] 0, 128
        %1343 = vxpose.xlu0.c.b16.cont [5/8] 0, 128
        %1344 = vxpose.xlu0.c.b16.cont [6/8] 0, 128
        %1345 = vxpose.xlu0.c.b16.cont [7/8] 0, 128
        %1346 = vxpose.xlu0.c.b16.end [8/8] 0, 128
        %v1347 = vpop.trf.xlu0
        %v1348 = vpop.trf.xlu0
        %v1349 = vpop.trf.xlu0
        %v1350 = vpop.trf.xlu0
        %v1351 = vpop.trf.xlu0
        %v1352 = vpop.trf.xlu0
        %v1353 = vpop.trf.xlu0
        %v1354 = vpop.trf.xlu0
        %1355 = vxpose.xlu0.c.b16.start [1/8] %v1241, 128
        %1356 = vxpose.xlu0.c.b16.cont [2/8] 0, 128
        %1357 = vxpose.xlu0.c.b16.cont [3/8] 0, 128
        %1358 = vxpose.xlu0.c.b16.cont [4/8] 0, 128
        %1359 = vxpose.xlu0.c.b16.cont [5/8] 0, 128
        %1360 = vxpose.xlu0.c.b16.cont [6/8] 0, 128
        %1361 = vxpose.xlu0.c.b16.cont [7/8] 0, 128
        %1362 = vxpose.xlu0.c.b16.end [8/8] 0, 128
        %v1363 = vpop.trf.xlu0
        %v1364 = vpop.trf.xlu0
        %v1365 = vpop.trf.xlu0
        %v1366 = vpop.trf.xlu0
        %v1367 = vpop.trf.xlu0
        %v1368 = vpop.trf.xlu0
        %v1369 = vpop.trf.xlu0
        %v1370 = vpop.trf.xlu0
        %v1371 = vrot.slane %v1315, 4
        %v1372 = vsel %vm975, %v1371, %v1251
        %v1374 = vunpack.c.l.s4 1983009808
        %v1375 = vunpack.c.0.s8 %v1374
        %v1376 = vperm.slane %v1372, %v1375
        %v1377 = vrot.slane %v1347, 4
        %v1378 = vsel %vm975, %v1377, %v1283
        %v1380 = vunpack.c.l.s4 1983009808
        %v1381 = vunpack.c.0.s8 %v1380
        %v1382 = vperm.slane %v1378, %v1381
        %v1383 = vrot.slane %v1382, 4
        %v1384 = vsel %vm975, %v1383, %v1376
        %v1386 = vunpack.c.l.s4 1934713408
        %v1387 = vunpack.c.0.s8 %v1386
        %v1388 = vperm.slane %v1384, %v1387
        %v1389 = vrot.slane %v1388, 4
        %v1390 = vsel %vm975, 0, %v1389
        %v1391 = vrot.slane %v1331, 4
        %v1392 = vsel %vm975, %v1391, %v1267
        %v1394 = vunpack.c.l.s4 1983009808
        %v1395 = vunpack.c.0.s8 %v1394
        %v1396 = vperm.slane %v1392, %v1395
        %v1397 = vrot.slane %v1363, 4
        %v1398 = vsel %vm975, %v1397, %v1299
        %v1400 = vunpack.c.l.s4 1983009808
        %v1401 = vunpack.c.0.s8 %v1400
        %v1402 = vperm.slane %v1398, %v1401
        %v1403 = vrot.slane %v1402, 4
        %v1404 = vsel %vm975, %v1403, %v1396
        %v1406 = vunpack.c.l.s4 1934713408
        %v1407 = vunpack.c.0.s8 %v1406
        %v1408 = vperm.slane %v1404, %v1407
        %v1409 = vrot.slane %v1408, 4
        %v1410 = vsel %vm975, 0, %v1409
        %v1413 = vpack.i.b16 %v1408, %v1388
        %v1414 = vshrl.u32 %v1388, 16
        %v1415 = vshrl.u32 %v1408, 16
        %v1416 = vpack.i.b16 %v1415, %v1414
        %v1419 = vpack.i.b16 %v1410, %v1390
        %v1420 = vshrl.u32 %v1390, 16
        %v1421 = vshrl.u32 %v1410, 16
        %v1422 = vpack.i.b16 %v1421, %v1420
        %vm1423 = vcmask 64512
        %v1425 = vsel %vm1423, %v1017, 0
        %vm1427 = vcmask 1043456
        %v1429 = vsel %vm1427, %v1413, 0
        %1431 = vmatpush.bf16.msra.mxu0 0
        %1432 = vmatpush.bf16.msra.mxu0 0
        %1433 = vmatpush.bf16.msra.mxu0 0
        %1434 = vmatpush.bf16.msra.mxu0 0
        %1435 = vmatpush.bf16.msra.mxu0 0
        %1436 = vmatpush.bf16.msra.mxu0 0
        %1437 = vmatpush.bf16.msra.mxu0 0
        %1438 = vmatpush.bf16.msra.mxu0 %v1429
        %1439 = vmatmul.bf16.gmra.mxu0 %v1425
        %v1440 = vpop.f32.mrf.mxu0
        %v1441 = vadd.f32 %v973, %v1440
        %v1442 = vpop.f32.mrf.mxu0
        %1443 = vdwg.mxu0
        %v1445 = vsel %vm1423, %v1020, 0
        %v1448 = vsel %vm1427, %v1416, 0
        %1450 = vmatpush.bf16.msra.mxu0 0
        %1451 = vmatpush.bf16.msra.mxu0 0
        %1452 = vmatpush.bf16.msra.mxu0 0
        %1453 = vmatpush.bf16.msra.mxu0 0
        %1454 = vmatpush.bf16.msra.mxu0 0
        %1455 = vmatpush.bf16.msra.mxu0 0
        %1456 = vmatpush.bf16.msra.mxu0 0
        %1457 = vmatpush.bf16.msra.mxu0 %v1448
        %1458 = vmatmul.bf16.gmra.mxu0 %v1445
        %v1459 = vpop.f32.mrf.mxu0
        %v1460 = vadd.f32 %v973, %v1459
        %v1461 = vpop.f32.mrf.mxu0
        %1462 = vdwg.mxu0
        %v1464 = vsel %vm1423, %v1023, 0
        %v1467 = vsel %vm1427, %v1419, 0
        %1469 = vmatpush.bf16.msra.mxu0 0
        %1470 = vmatpush.bf16.msra.mxu0 0
        %1471 = vmatpush.bf16.msra.mxu0 0
        %1472 = vmatpush.bf16.msra.mxu0 0
        %1473 = vmatpush.bf16.msra.mxu0 0
        %1474 = vmatpush.bf16.msra.mxu0 0
        %1475 = vmatpush.bf16.msra.mxu0 0
        %1476 = vmatpush.bf16.msra.mxu0 %v1467
        %1477 = vmatmul.bf16.gmra.mxu0 %v1464
        %v1478 = vpop.f32.mrf.mxu0
        %v1479 = vadd.f32 %v973, %v1478
        %v1480 = vpop.f32.mrf.mxu0
        %1481 = vdwg.mxu0
        %v1483 = vsel %vm1423, %v1026, 0
        %v1486 = vsel %vm1427, %v1422, 0
        %1488 = vmatpush.bf16.msra.mxu0 0
        %1489 = vmatpush.bf16.msra.mxu0 0
        %1490 = vmatpush.bf16.msra.mxu0 0
        %1491 = vmatpush.bf16.msra.mxu0 0
        %1492 = vmatpush.bf16.msra.mxu0 0
        %1493 = vmatpush.bf16.msra.mxu0 0
        %1494 = vmatpush.bf16.msra.mxu0 0
        %1495 = vmatpush.bf16.msra.mxu0 %v1486
        %1496 = vmatmul.bf16.gmra.mxu0 %v1483
        %v1497 = vpop.f32.mrf.mxu0
        %v1498 = vadd.f32 %v973, %v1497
        %v1499 = vpop.f32.mrf.mxu0
        %1500 = vdwg.mxu0
        %v1501 = vsel %vm1423, %v1441, -inf
        %1502 = vmax.xlane.f32.xlu0 %v1501
        %v1503 = vpop.xlane.xlu0 %1502
        %v1504 = vsel %vm1423, %v1460, -inf
        %1505 = vmax.xlane.f32.xlu0 %v1504
        %v1506 = vpop.xlane.xlu0 %1505
        %v1507 = vsel %vm1423, %v1479, -inf
        %1508 = vmax.xlane.f32.xlu0 %v1507
        %v1509 = vpop.xlane.xlu0 %1508
        %v1510 = vsel %vm1423, %v1498, -inf
        %1511 = vmax.xlane.f32.xlu0 %v1510
        %v1512 = vpop.xlane.xlu0 %1511
        %v1513 = vsub.f32 %v1441, %v1503
        %v1514 = vsub.f32 %v1460, %v1506
        %v1515 = vsub.f32 %v1479, %v1509
        %v1516 = vsub.f32 %v1498, %v1512
        %v1517 = vmul.f32 %v1513, 1.442695
        %v1518 = vpow.pop %v1517
        %v1519 = vmul.f32 %v1514, 1.442695
        %v1520 = vpow.pop %v1519
        %v1521 = vmul.f32 %v1515, 1.442695
        %v1522 = vpow.pop %v1521
        %v1523 = vmul.f32 %v1516, 1.442695
        %v1524 = vpow.pop %v1523
        %v1525 = vsel %vm1423, %v1518, 0.0
        %1526 = vadd.xlane.f32.xlu0 %v1525
        %v1527 = vpop.xlane.xlu0 %1526
        %v1528 = vsel %vm1423, %v1520, 0.0
        %1529 = vadd.xlane.f32.xlu0 %v1528
        %v1530 = vpop.xlane.xlu0 %1529
        %v1531 = vsel %vm1423, %v1522, 0.0
        %1532 = vadd.xlane.f32.xlu0 %v1531
        %v1533 = vpop.xlane.xlu0 %1532
        %v1534 = vsel %vm1423, %v1524, 0.0
        %1535 = vadd.xlane.f32.xlu0 %v1534
        %v1536 = vpop.xlane.xlu0 %1535
        %v1537 = vpack.c.bf16 %v1518, %v1518
        %v1538 = vpack.c.bf16 %v1520, %v1520
        %v1539 = vpack.c.bf16 %v1522, %v1522
        %v1540 = vpack.c.bf16 %v1524, %v1524
        %1541 = vxpose.xlu0.c.b16.start [1/8] %v964, 128
        %1542 = vxpose.xlu0.c.b16.cont [2/8] 0, 128
        %1543 = vxpose.xlu0.c.b16.cont [3/8] 0, 128
        %1544 = vxpose.xlu0.c.b16.cont [4/8] 0, 128
        %1545 = vxpose.xlu0.c.b16.cont [5/8] 0, 128
        %1546 = vxpose.xlu0.c.b16.cont [6/8] 0, 128
        %1547 = vxpose.xlu0.c.b16.cont [7/8] 0, 128
        %1548 = vxpose.xlu0.c.b16.end [8/8] 0, 128
        %v1549 = vpop.trf.xlu0
        %v1550 = vpop.trf.xlu0
        %v1551 = vpop.trf.xlu0
        %v1552 = vpop.trf.xlu0
        %v1553 = vpop.trf.xlu0
        %v1554 = vpop.trf.xlu0
        %v1555 = vpop.trf.xlu0
        %v1556 = vpop.trf.xlu0
        %1557 = vxpose.xlu0.c.b16.start [1/8] %v965, 128
        %1558 = vxpose.xlu0.c.b16.cont [2/8] 0, 128
        %1559 = vxpose.xlu0.c.b16.cont [3/8] 0, 128
        %1560 = vxpose.xlu0.c.b16.cont [4/8] 0, 128
        %1561 = vxpose.xlu0.c.b16.cont [5/8] 0, 128
        %1562 = vxpose.xlu0.c.b16.cont [6/8] 0, 128
        %1563 = vxpose.xlu0.c.b16.cont [7/8] 0, 128
        %1564 = vxpose.xlu0.c.b16.end [8/8] 0, 128
        %v1565 = vpop.trf.xlu0
        %v1566 = vpop.trf.xlu0
        %v1567 = vpop.trf.xlu0
        %v1568 = vpop.trf.xlu0
        %v1569 = vpop.trf.xlu0
        %v1570 = vpop.trf.xlu0
        %v1571 = vpop.trf.xlu0
        %v1572 = vpop.trf.xlu0
        %1573 = vxpose.xlu0.c.b16.start [1/8] %v966, 128
        %1574 = vxpose.xlu0.c.b16.cont [2/8] 0, 128
        %1575 = vxpose.xlu0.c.b16.cont [3/8] 0, 128
        %1576 = vxpose.xlu0.c.b16.cont [4/8] 0, 128
        %1577 = vxpose.xlu0.c.b16.cont [5/8] 0, 128
        %1578 = vxpose.xlu0.c.b16.cont [6/8] 0, 128
        %1579 = vxpose.xlu0.c.b16.cont [7/8] 0, 128
        %1580 = vxpose.xlu0.c.b16.end [8/8] 0, 128
        %v1581 = vpop.trf.xlu0
        %v1582 = vpop.trf.xlu0
        %v1583 = vpop.trf.xlu0
        %v1584 = vpop.trf.xlu0
        %v1585 = vpop.trf.xlu0
        %v1586 = vpop.trf.xlu0
        %v1587 = vpop.trf.xlu0
        %v1588 = vpop.trf.xlu0
        %1589 = vxpose.xlu0.c.b16.start [1/8] %v967, 128
        %1590 = vxpose.xlu0.c.b16.cont [2/8] 0, 128
        %1591 = vxpose.xlu0.c.b16.cont [3/8] 0, 128
        %1592 = vxpose.xlu0.c.b16.cont [4/8] 0, 128
        %1593 = vxpose.xlu0.c.b16.cont [5/8] 0, 128
        %1594 = vxpose.xlu0.c.b16.cont [6/8] 0, 128
        %1595 = vxpose.xlu0.c.b16.cont [7/8] 0, 128
        %1596 = vxpose.xlu0.c.b16.end [8/8] 0, 128
        %v1597 = vpop.trf.xlu0
        %v1598 = vpop.trf.xlu0
        %v1599 = vpop.trf.xlu0
        %v1600 = vpop.trf.xlu0
        %v1601 = vpop.trf.xlu0
        %v1602 = vpop.trf.xlu0
        %v1603 = vpop.trf.xlu0
        %v1604 = vpop.trf.xlu0
        %1605 = vxpose.xlu0.c.b16.start [1/8] %v968, 128
        %1606 = vxpose.xlu0.c.b16.cont [2/8] 0, 128
        %1607 = vxpose.xlu0.c.b16.cont [3/8] 0, 128
        %1608 = vxpose.xlu0.c.b16.cont [4/8] 0, 128
        %1609 = vxpose.xlu0.c.b16.cont [5/8] 0, 128
        %1610 = vxpose.xlu0.c.b16.cont [6/8] 0, 128
        %1611 = vxpose.xlu0.c.b16.cont [7/8] 0, 128
        %1612 = vxpose.xlu0.c.b16.end [8/8] 0, 128
        %v1613 = vpop.trf.xlu0
        %v1614 = vpop.trf.xlu0
        %v1615 = vpop.trf.xlu0
        %v1616 = vpop.trf.xlu0
        %v1617 = vpop.trf.xlu0
        %v1618 = vpop.trf.xlu0
        %v1619 = vpop.trf.xlu0
        %v1620 = vpop.trf.xlu0
        %1621 = vxpose.xlu0.c.b16.start [1/8] %v969, 128
        %1622 = vxpose.xlu0.c.b16.cont [2/8] 0, 128
        %1623 = vxpose.xlu0.c.b16.cont [3/8] 0, 128
        %1624 = vxpose.xlu0.c.b16.cont [4/8] 0, 128
        %1625 = vxpose.xlu0.c.b16.cont [5/8] 0, 128
        %1626 = vxpose.xlu0.c.b16.cont [6/8] 0, 128
        %1627 = vxpose.xlu0.c.b16.cont [7/8] 0, 128
        %1628 = vxpose.xlu0.c.b16.end [8/8] 0, 128
        %v1629 = vpop.trf.xlu0
        %v1630 = vpop.trf.xlu0
        %v1631 = vpop.trf.xlu0
        %v1632 = vpop.trf.xlu0
        %v1633 = vpop.trf.xlu0
        %v1634 = vpop.trf.xlu0
        %v1635 = vpop.trf.xlu0
        %v1636 = vpop.trf.xlu0
        %1637 = vxpose.xlu0.c.b16.start [1/8] %v970, 128
        %1638 = vxpose.xlu0.c.b16.cont [2/8] 0, 128
        %1639 = vxpose.xlu0.c.b16.cont [3/8] 0, 128
        %1640 = vxpose.xlu0.c.b16.cont [4/8] 0, 128
        %1641 = vxpose.xlu0.c.b16.cont [5/8] 0, 128
        %1642 = vxpose.xlu0.c.b16.cont [6/8] 0, 128
        %1643 = vxpose.xlu0.c.b16.cont [7/8] 0, 128
        %1644 = vxpose.xlu0.c.b16.end [8/8] 0, 128
        %v1645 = vpop.trf.xlu0
        %v1646 = vpop.trf.xlu0
        %v1647 = vpop.trf.xlu0
        %v1648 = vpop.trf.xlu0
        %v1649 = vpop.trf.xlu0
        %v1650 = vpop.trf.xlu0
        %v1651 = vpop.trf.xlu0
        %v1652 = vpop.trf.xlu0
        %1653 = vxpose.xlu0.c.b16.start [1/8] %v971, 128
        %1654 = vxpose.xlu0.c.b16.cont [2/8] 0, 128
        %1655 = vxpose.xlu0.c.b16.cont [3/8] 0, 128
        %1656 = vxpose.xlu0.c.b16.cont [4/8] 0, 128
        %1657 = vxpose.xlu0.c.b16.cont [5/8] 0, 128
        %1658 = vxpose.xlu0.c.b16.cont [6/8] 0, 128
        %1659 = vxpose.xlu0.c.b16.cont [7/8] 0, 128
        %1660 = vxpose.xlu0.c.b16.end [8/8] 0, 128
        %v1661 = vpop.trf.xlu0
        %v1662 = vpop.trf.xlu0
        %v1663 = vpop.trf.xlu0
        %v1664 = vpop.trf.xlu0
        %v1665 = vpop.trf.xlu0
        %v1666 = vpop.trf.xlu0
        %v1667 = vpop.trf.xlu0
        %v1668 = vpop.trf.xlu0
        %v1669 = vrot.slane %v1613, 4
        %v1670 = vsel %vm975, %v1669, %v1549
        %v1672 = vunpack.c.l.s4 1983009808
        %v1673 = vunpack.c.0.s8 %v1672
        %v1674 = vperm.slane %v1670, %v1673
        %v1675 = vrot.slane %v1645, 4
        %v1676 = vsel %vm975, %v1675, %v1581
        %v1678 = vunpack.c.l.s4 1983009808
        %v1679 = vunpack.c.0.s8 %v1678
        %v1680 = vperm.slane %v1676, %v1679
        %v1681 = vrot.slane %v1680, 4
        %v1682 = vsel %vm975, %v1681, %v1674
        %v1683 = vrot.slane %v1674, 4
        %v1684 = vsel %vm975, %v1680, %v1683
        %v1686 = vunpack.c.l.s4 1934713408
        %v1687 = vunpack.c.0.s8 %v1686
        %v1688 = vperm.slane %v1682, %v1687
        %v1690 = vunpack.c.l.s4 1934713408
        %v1691 = vunpack.c.0.s8 %v1690
        %v1692 = vperm.slane %v1684, %v1691
        %v1693 = vrot.slane %v1688, 4
        %v1694 = vsel %vm975, 0, %v1693
        %v1695 = vrot.slane %v1692, 4
        %v1696 = vsel %vm975, 0, %v1695
        %v1697 = vrot.slane %v1629, 4
        %v1698 = vsel %vm975, %v1697, %v1565
        %v1700 = vunpack.c.l.s4 1983009808
        %v1701 = vunpack.c.0.s8 %v1700
        %v1702 = vperm.slane %v1698, %v1701
        %v1703 = vrot.slane %v1661, 4
        %v1704 = vsel %vm975, %v1703, %v1597
        %v1706 = vunpack.c.l.s4 1983009808
        %v1707 = vunpack.c.0.s8 %v1706
        %v1708 = vperm.slane %v1704, %v1707
        %v1709 = vrot.slane %v1708, 4
        %v1710 = vsel %vm975, %v1709, %v1702
        %v1711 = vrot.slane %v1702, 4
        %v1712 = vsel %vm975, %v1708, %v1711
        %v1714 = vunpack.c.l.s4 1934713408
        %v1715 = vunpack.c.0.s8 %v1714
        %v1716 = vperm.slane %v1710, %v1715
        %v1718 = vunpack.c.l.s4 1934713408
        %v1719 = vunpack.c.0.s8 %v1718
        %v1720 = vperm.slane %v1712, %v1719
        %v1721 = vrot.slane %v1716, 4
        %v1722 = vsel %vm975, 0, %v1721
        %v1723 = vrot.slane %v1720, 4
        %v1724 = vsel %vm975, 0, %v1723
        %v1727 = vpack.i.b16 %v1716, %v1688
        %v1729 = vshrl.u32 %v1688, 16
        %v1730 = vshrl.u32 %v1716, 16
        %v1731 = vpack.i.b16 %v1730, %v1729
        %v1735 = vpack.i.b16 %v1722, %v1694
        %v1737 = vshrl.u32 %v1694, 16
        %v1738 = vshrl.u32 %v1722, 16
        %v1739 = vpack.i.b16 %v1738, %v1737
        %v1743 = vpack.i.b16 %v1720, %v1692
        %v1745 = vshrl.u32 %v1692, 16
        %v1746 = vshrl.u32 %v1720, 16
        %v1747 = vpack.i.b16 %v1746, %v1745
        %v1751 = vpack.i.b16 %v1724, %v1696
        %v1753 = vshrl.u32 %v1696, 16
        %v1754 = vshrl.u32 %v1724, 16
        %v1755 = vpack.i.b16 %v1754, %v1753
        %1757 = vxpose.xlu0.c.b16.start [1/8] %v1727, 128
        %1758 = vxpose.xlu0.c.b16.cont [2/8] 0, 128
        %1759 = vxpose.xlu0.c.b16.cont [3/8] 0, 128
        %1760 = vxpose.xlu0.c.b16.cont [4/8] 0, 128
        %1761 = vxpose.xlu0.c.b16.cont [5/8] 0, 128
        %1762 = vxpose.xlu0.c.b16.cont [6/8] 0, 128
        %1763 = vxpose.xlu0.c.b16.cont [7/8] 0, 128
        %1764 = vxpose.xlu0.c.b16.end [8/8] 0, 128
        %v1765 = vpop.trf.xlu0
        %v1766 = vpop.trf.xlu0
        %v1767 = vpop.trf.xlu0
        %v1768 = vpop.trf.xlu0
        %v1769 = vpop.trf.xlu0
        %v1770 = vpop.trf.xlu0
        %v1771 = vpop.trf.xlu0
        %v1772 = vpop.trf.xlu0
        %1773 = vxpose.xlu0.c.b16.start [1/8] %v1731, 128
        %1774 = vxpose.xlu0.c.b16.cont [2/8] 0, 128
        %1775 = vxpose.xlu0.c.b16.cont [3/8] 0, 128
        %1776 = vxpose.xlu0.c.b16.cont [4/8] 0, 128
        %1777 = vxpose.xlu0.c.b16.cont [5/8] 0, 128
        %1778 = vxpose.xlu0.c.b16.cont [6/8] 0, 128
        %1779 = vxpose.xlu0.c.b16.cont [7/8] 0, 128
        %1780 = vxpose.xlu0.c.b16.end [8/8] 0, 128
        %v1781 = vpop.trf.xlu0
        %v1782 = vpop.trf.xlu0
        %v1783 = vpop.trf.xlu0
        %v1784 = vpop.trf.xlu0
        %v1785 = vpop.trf.xlu0
        %v1786 = vpop.trf.xlu0
        %v1787 = vpop.trf.xlu0
        %v1788 = vpop.trf.xlu0
        %1789 = vxpose.xlu0.c.b16.start [1/8] %v1735, 128
        %1790 = vxpose.xlu0.c.b16.cont [2/8] 0, 128
        %1791 = vxpose.xlu0.c.b16.cont [3/8] 0, 128
        %1792 = vxpose.xlu0.c.b16.cont [4/8] 0, 128
        %1793 = vxpose.xlu0.c.b16.cont [5/8] 0, 128
        %1794 = vxpose.xlu0.c.b16.cont [6/8] 0, 128
        %1795 = vxpose.xlu0.c.b16.cont [7/8] 0, 128
        %1796 = vxpose.xlu0.c.b16.end [8/8] 0, 128
        %v1797 = vpop.trf.xlu0
        %v1798 = vpop.trf.xlu0
        %v1799 = vpop.trf.xlu0
        %v1800 = vpop.trf.xlu0
        %v1801 = vpop.trf.xlu0
        %v1802 = vpop.trf.xlu0
        %v1803 = vpop.trf.xlu0
        %v1804 = vpop.trf.xlu0
        %1805 = vxpose.xlu0.c.b16.start [1/8] %v1739, 128
        %1806 = vxpose.xlu0.c.b16.cont [2/8] 0, 128
        %1807 = vxpose.xlu0.c.b16.cont [3/8] 0, 128
        %1808 = vxpose.xlu0.c.b16.cont [4/8] 0, 128
        %1809 = vxpose.xlu0.c.b16.cont [5/8] 0, 128
        %1810 = vxpose.xlu0.c.b16.cont [6/8] 0, 128
        %1811 = vxpose.xlu0.c.b16.cont [7/8] 0, 128
        %1812 = vxpose.xlu0.c.b16.end [8/8] 0, 128
        %v1813 = vpop.trf.xlu0
        %v1814 = vpop.trf.xlu0
        %v1815 = vpop.trf.xlu0
        %v1816 = vpop.trf.xlu0
        %v1817 = vpop.trf.xlu0
        %v1818 = vpop.trf.xlu0
        %v1819 = vpop.trf.xlu0
        %v1820 = vpop.trf.xlu0
        %1821 = vxpose.xlu0.c.b16.start [1/8] %v1743, 128
        %1822 = vxpose.xlu0.c.b16.cont [2/8] 0, 128
        %1823 = vxpose.xlu0.c.b16.cont [3/8] 0, 128
        %1824 = vxpose.xlu0.c.b16.cont [4/8] 0, 128
        %1825 = vxpose.xlu0.c.b16.cont [5/8] 0, 128
        %1826 = vxpose.xlu0.c.b16.cont [6/8] 0, 128
        %1827 = vxpose.xlu0.c.b16.cont [7/8] 0, 128
        %1828 = vxpose.xlu0.c.b16.end [8/8] 0, 128
        %v1829 = vpop.trf.xlu0
        %v1830 = vpop.trf.xlu0
        %v1831 = vpop.trf.xlu0
        %v1832 = vpop.trf.xlu0
        %v1833 = vpop.trf.xlu0
        %v1834 = vpop.trf.xlu0
        %v1835 = vpop.trf.xlu0
        %v1836 = vpop.trf.xlu0
        %1837 = vxpose.xlu0.c.b16.start [1/8] %v1747, 128
        %1838 = vxpose.xlu0.c.b16.cont [2/8] 0, 128
        %1839 = vxpose.xlu0.c.b16.cont [3/8] 0, 128
        %1840 = vxpose.xlu0.c.b16.cont [4/8] 0, 128
        %1841 = vxpose.xlu0.c.b16.cont [5/8] 0, 128
        %1842 = vxpose.xlu0.c.b16.cont [6/8] 0, 128
        %1843 = vxpose.xlu0.c.b16.cont [7/8] 0, 128
        %1844 = vxpose.xlu0.c.b16.end [8/8] 0, 128
        %v1845 = vpop.trf.xlu0
        %v1846 = vpop.trf.xlu0
        %v1847 = vpop.trf.xlu0
        %v1848 = vpop.trf.xlu0
        %v1849 = vpop.trf.xlu0
        %v1850 = vpop.trf.xlu0
        %v1851 = vpop.trf.xlu0
        %v1852 = vpop.trf.xlu0
        %1853 = vxpose.xlu0.c.b16.start [1/8] %v1751, 128
        %1854 = vxpose.xlu0.c.b16.cont [2/8] 0, 128
        %1855 = vxpose.xlu0.c.b16.cont [3/8] 0, 128
        %1856 = vxpose.xlu0.c.b16.cont [4/8] 0, 128
        %1857 = vxpose.xlu0.c.b16.cont [5/8] 0, 128
        %1858 = vxpose.xlu0.c.b16.cont [6/8] 0, 128
        %1859 = vxpose.xlu0.c.b16.cont [7/8] 0, 128
        %1860 = vxpose.xlu0.c.b16.end [8/8] 0, 128
        %v1861 = vpop.trf.xlu0
        %v1862 = vpop.trf.xlu0
        %v1863 = vpop.trf.xlu0
        %v1864 = vpop.trf.xlu0
        %v1865 = vpop.trf.xlu0
        %v1866 = vpop.trf.xlu0
        %v1867 = vpop.trf.xlu0
        %v1868 = vpop.trf.xlu0
        %1869 = vxpose.xlu0.c.b16.start [1/8] %v1755, 128
        %1870 = vxpose.xlu0.c.b16.cont [2/8] 0, 128
        %1871 = vxpose.xlu0.c.b16.cont [3/8] 0, 128
        %1872 = vxpose.xlu0.c.b16.cont [4/8] 0, 128
        %1873 = vxpose.xlu0.c.b16.cont [5/8] 0, 128
        %1874 = vxpose.xlu0.c.b16.cont [6/8] 0, 128
        %1875 = vxpose.xlu0.c.b16.cont [7/8] 0, 128
        %1876 = vxpose.xlu0.c.b16.end [8/8] 0, 128
        %v1877 = vpop.trf.xlu0
        %v1878 = vpop.trf.xlu0
        %v1879 = vpop.trf.xlu0
        %v1880 = vpop.trf.xlu0
        %v1881 = vpop.trf.xlu0
        %v1882 = vpop.trf.xlu0
        %v1883 = vpop.trf.xlu0
        %v1884 = vpop.trf.xlu0
        %v1885 = vrot.slane %v1829, 4
        %v1886 = vsel %vm975, %v1885, %v1765
        %v1888 = vunpack.c.l.s4 1983009808
        %v1889 = vunpack.c.0.s8 %v1888
        %v1890 = vperm.slane %v1886, %v1889
        %v1891 = vrot.slane %v1861, 4
        %v1892 = vsel %vm975, %v1891, %v1797
        %v1894 = vunpack.c.l.s4 1983009808
        %v1895 = vunpack.c.0.s8 %v1894
        %v1896 = vperm.slane %v1892, %v1895
        %v1897 = vrot.slane %v1896, 4
        %v1898 = vsel %vm975, %v1897, %v1890
        %v1900 = vunpack.c.l.s4 1934713408
        %v1901 = vunpack.c.0.s8 %v1900
        %v1902 = vperm.slane %v1898, %v1901
        %v1903 = vrot.slane %v1902, 4
        %v1904 = vsel %vm975, 0, %v1903
        %v1905 = vrot.slane %v1845, 4
        %v1906 = vsel %vm975, %v1905, %v1781
        %v1908 = vunpack.c.l.s4 1983009808
        %v1909 = vunpack.c.0.s8 %v1908
        %v1910 = vperm.slane %v1906, %v1909
        %v1911 = vrot.slane %v1877, 4
        %v1912 = vsel %vm975, %v1911, %v1813
        %v1914 = vunpack.c.l.s4 1983009808
        %v1915 = vunpack.c.0.s8 %v1914
        %v1916 = vperm.slane %v1912, %v1915
        %v1917 = vrot.slane %v1916, 4
        %v1918 = vsel %vm975, %v1917, %v1910
        %v1920 = vunpack.c.l.s4 1934713408
        %v1921 = vunpack.c.0.s8 %v1920
        %v1922 = vperm.slane %v1918, %v1921
        %v1923 = vrot.slane %v1922, 4
        %v1924 = vsel %vm975, 0, %v1923
        %v1927 = vpack.i.b16 %v1922, %v1902
        %v1928 = vshrl.u32 %v1902, 16
        %v1929 = vshrl.u32 %v1922, 16
        %v1930 = vpack.i.b16 %v1929, %v1928
        %v1933 = vpack.i.b16 %v1924, %v1904
        %v1934 = vshrl.u32 %v1904, 16
        %v1935 = vshrl.u32 %v1924, 16
        %v1936 = vpack.i.b16 %v1935, %v1934
        %v1938 = vsel %vm1423, %v1927, 0
        %v1941 = vsel %vm1423, %v1537, 0
        %1943 = vmatpush.bf16.xpose.msra.mxu0 0
        %1944 = vmatpush.bf16.xpose.msra.mxu0 0
        %1945 = vmatpush.bf16.xpose.msra.mxu0 0
        %1946 = vmatpush.bf16.xpose.msra.mxu0 0
        %1947 = vmatpush.bf16.xpose.msra.mxu0 0
        %1948 = vmatpush.bf16.xpose.msra.mxu0 0
        %1949 = vmatpush.bf16.xpose.msra.mxu0 0
        %1950 = vmatpush.bf16.xpose.msra.mxu0 %v1941
        %1951 = vmatmul.bf16.gmra.mxu0 %v1938
        %v1952 = vpop.f32.mrf.mxu0
        %v1953 = vadd.f32 0.0, %v1952
        %v1954 = vpop.f32.mrf.mxu0
        %1955 = vdwg.mxu0
        %v1957 = vsel %vm1423, %v1930, 0
        %v1960 = vsel %vm1423, %v1538, 0
        %1962 = vmatpush.bf16.xpose.msra.mxu0 0
        %1963 = vmatpush.bf16.xpose.msra.mxu0 0
        %1964 = vmatpush.bf16.xpose.msra.mxu0 0
        %1965 = vmatpush.bf16.xpose.msra.mxu0 0
        %1966 = vmatpush.bf16.xpose.msra.mxu0 0
        %1967 = vmatpush.bf16.xpose.msra.mxu0 0
        %1968 = vmatpush.bf16.xpose.msra.mxu0 0
        %1969 = vmatpush.bf16.xpose.msra.mxu0 %v1960
        %1970 = vmatmul.bf16.gmra.mxu0 %v1957
        %v1971 = vpop.f32.mrf.mxu0
        %v1972 = vadd.f32 0.0, %v1971
        %v1973 = vpop.f32.mrf.mxu0
        %1974 = vdwg.mxu0
        %v1976 = vsel %vm1423, %v1933, 0
        %v1979 = vsel %vm1423, %v1539, 0
        %1981 = vmatpush.bf16.xpose.msra.mxu0 0
        %1982 = vmatpush.bf16.xpose.msra.mxu0 0
        %1983 = vmatpush.bf16.xpose.msra.mxu0 0
        %1984 = vmatpush.bf16.xpose.msra.mxu0 0
        %1985 = vmatpush.bf16.xpose.msra.mxu0 0
        %1986 = vmatpush.bf16.xpose.msra.mxu0 0
        %1987 = vmatpush.bf16.xpose.msra.mxu0 0
        %1988 = vmatpush.bf16.xpose.msra.mxu0 %v1979
        %1989 = vmatmul.bf16.gmra.mxu0 %v1976
        %v1990 = vpop.f32.mrf.mxu0
        %v1991 = vadd.f32 0.0, %v1990
        %v1992 = vpop.f32.mrf.mxu0
        %1993 = vdwg.mxu0
        %v1995 = vsel %vm1423, %v1936, 0
        %v1998 = vsel %vm1423, %v1540, 0
        %2000 = vmatpush.bf16.xpose.msra.mxu0 0
        %2001 = vmatpush.bf16.xpose.msra.mxu0 0
        %2002 = vmatpush.bf16.xpose.msra.mxu0 0
        %2003 = vmatpush.bf16.xpose.msra.mxu0 0
        %2004 = vmatpush.bf16.xpose.msra.mxu0 0
        %2005 = vmatpush.bf16.xpose.msra.mxu0 0
        %2006 = vmatpush.bf16.xpose.msra.mxu0 0
        %2007 = vmatpush.bf16.xpose.msra.mxu0 %v1998
        %2008 = vmatmul.bf16.gmra.mxu0 %v1995
        %v2009 = vpop.f32.mrf.mxu0
        %v2010 = vadd.f32 0.0, %v2009
        %v2011 = vpop.f32.mrf.mxu0
        %2012 = vdwg.mxu0
        %2013 = vxpose.xlu0.b32.start [1/16] %v1953, 128
        %2014 = vxpose.xlu0.b32.cont [2/16] 0.0, 128
        %2015 = vxpose.xlu0.b32.cont [3/16] 0.0, 128
        %2016 = vxpose.xlu0.b32.cont [4/16] 0.0, 128
        %2017 = vxpose.xlu0.b32.cont [5/16] 0.0, 128
        %2018 = vxpose.xlu0.b32.cont [6/16] 0.0, 128
        %2019 = vxpose.xlu0.b32.cont [7/16] 0.0, 128
        %2020 = vxpose.xlu0.b32.cont [8/16] 0.0, 128
        %2021 = vxpose.xlu0.b32.cont [9/16] 0.0, 128
        %2022 = vxpose.xlu0.b32.cont [10/16] 0.0, 128
        %2023 = vxpose.xlu0.b32.cont [11/16] 0.0, 128
        %2024 = vxpose.xlu0.b32.cont [12/16] 0.0, 128
        %2025 = vxpose.xlu0.b32.cont [13/16] 0.0, 128
        %2026 = vxpose.xlu0.b32.cont [14/16] 0.0, 128
        %2027 = vxpose.xlu0.b32.cont [15/16] 0.0, 128
        %2028 = vxpose.xlu0.b32.end [16/16] 0.0, 128
        %v2029 = vpop.trf.xlu0
        %v2030 = vpop.trf.xlu0
        %v2031 = vpop.trf.xlu0
        %v2032 = vpop.trf.xlu0
        %v2033 = vpop.trf.xlu0
        %v2034 = vpop.trf.xlu0
        %v2035 = vpop.trf.xlu0
        %v2036 = vpop.trf.xlu0
        %v2037 = vpop.trf.xlu0
        %v2038 = vpop.trf.xlu0
        %v2039 = vpop.trf.xlu0
        %v2040 = vpop.trf.xlu0
        %v2041 = vpop.trf.xlu0
        %v2042 = vpop.trf.xlu0
        %v2043 = vpop.trf.xlu0
        %v2044 = vpop.trf.xlu0
        %2045 = vxpose.xlu0.b32.start [1/16] %v1972, 128
        %2046 = vxpose.xlu0.b32.cont [2/16] 0.0, 128
        %2047 = vxpose.xlu0.b32.cont [3/16] 0.0, 128
        %2048 = vxpose.xlu0.b32.cont [4/16] 0.0, 128
        %2049 = vxpose.xlu0.b32.cont [5/16] 0.0, 128
        %2050 = vxpose.xlu0.b32.cont [6/16] 0.0, 128
        %2051 = vxpose.xlu0.b32.cont [7/16] 0.0, 128
        %2052 = vxpose.xlu0.b32.cont [8/16] 0.0, 128
        %2053 = vxpose.xlu0.b32.cont [9/16] 0.0, 128
        %2054 = vxpose.xlu0.b32.cont [10/16] 0.0, 128
        %2055 = vxpose.xlu0.b32.cont [11/16] 0.0, 128
        %2056 = vxpose.xlu0.b32.cont [12/16] 0.0, 128
        %2057 = vxpose.xlu0.b32.cont [13/16] 0.0, 128
        %2058 = vxpose.xlu0.b32.cont [14/16] 0.0, 128
        %2059 = vxpose.xlu0.b32.cont [15/16] 0.0, 128
        %2060 = vxpose.xlu0.b32.end [16/16] 0.0, 128
        %v2061 = vpop.trf.xlu0
        %v2062 = vpop.trf.xlu0
        %v2063 = vpop.trf.xlu0
        %v2064 = vpop.trf.xlu0
        %v2065 = vpop.trf.xlu0
        %v2066 = vpop.trf.xlu0
        %v2067 = vpop.trf.xlu0
        %v2068 = vpop.trf.xlu0
        %v2069 = vpop.trf.xlu0
        %v2070 = vpop.trf.xlu0
        %v2071 = vpop.trf.xlu0
        %v2072 = vpop.trf.xlu0
        %v2073 = vpop.trf.xlu0
        %v2074 = vpop.trf.xlu0
        %v2075 = vpop.trf.xlu0
        %v2076 = vpop.trf.xlu0
        %2077 = vxpose.xlu0.b32.start [1/16] %v1991, 128
        %2078 = vxpose.xlu0.b32.cont [2/16] 0.0, 128
        %2079 = vxpose.xlu0.b32.cont [3/16] 0.0, 128
        %2080 = vxpose.xlu0.b32.cont [4/16] 0.0, 128
        %2081 = vxpose.xlu0.b32.cont [5/16] 0.0, 128
        %2082 = vxpose.xlu0.b32.cont [6/16] 0.0, 128
        %2083 = vxpose.xlu0.b32.cont [7/16] 0.0, 128
        %2084 = vxpose.xlu0.b32.cont [8/16] 0.0, 128
        %2085 = vxpose.xlu0.b32.cont [9/16] 0.0, 128
        %2086 = vxpose.xlu0.b32.cont [10/16] 0.0, 128
        %2087 = vxpose.xlu0.b32.cont [11/16] 0.0, 128
        %2088 = vxpose.xlu0.b32.cont [12/16] 0.0, 128
        %2089 = vxpose.xlu0.b32.cont [13/16] 0.0, 128
        %2090 = vxpose.xlu0.b32.cont [14/16] 0.0, 128
        %2091 = vxpose.xlu0.b32.cont [15/16] 0.0, 128
        %2092 = vxpose.xlu0.b32.end [16/16] 0.0, 128
        %v2093 = vpop.trf.xlu0
        %v2094 = vpop.trf.xlu0
        %v2095 = vpop.trf.xlu0
        %v2096 = vpop.trf.xlu0
        %v2097 = vpop.trf.xlu0
        %v2098 = vpop.trf.xlu0
        %v2099 = vpop.trf.xlu0
        %v2100 = vpop.trf.xlu0
        %v2101 = vpop.trf.xlu0
        %v2102 = vpop.trf.xlu0
        %v2103 = vpop.trf.xlu0
        %v2104 = vpop.trf.xlu0
        %v2105 = vpop.trf.xlu0
        %v2106 = vpop.trf.xlu0
        %v2107 = vpop.trf.xlu0
        %v2108 = vpop.trf.xlu0
        %2109 = vxpose.xlu0.b32.start [1/16] %v2010, 128
        %2110 = vxpose.xlu0.b32.cont [2/16] 0.0, 128
        %2111 = vxpose.xlu0.b32.cont [3/16] 0.0, 128
        %2112 = vxpose.xlu0.b32.cont [4/16] 0.0, 128
        %2113 = vxpose.xlu0.b32.cont [5/16] 0.0, 128
        %2114 = vxpose.xlu0.b32.cont [6/16] 0.0, 128
        %2115 = vxpose.xlu0.b32.cont [7/16] 0.0, 128
        %2116 = vxpose.xlu0.b32.cont [8/16] 0.0, 128
        %2117 = vxpose.xlu0.b32.cont [9/16] 0.0, 128
        %2118 = vxpose.xlu0.b32.cont [10/16] 0.0, 128
        %2119 = vxpose.xlu0.b32.cont [11/16] 0.0, 128
        %2120 = vxpose.xlu0.b32.cont [12/16] 0.0, 128
        %2121 = vxpose.xlu0.b32.cont [13/16] 0.0, 128
        %2122 = vxpose.xlu0.b32.cont [14/16] 0.0, 128
        %2123 = vxpose.xlu0.b32.cont [15/16] 0.0, 128
        %2124 = vxpose.xlu0.b32.end [16/16] 0.0, 128
        %v2125 = vpop.trf.xlu0
        %v2126 = vpop.trf.xlu0
        %v2127 = vpop.trf.xlu0
        %v2128 = vpop.trf.xlu0
        %v2129 = vpop.trf.xlu0
        %v2130 = vpop.trf.xlu0
        %v2131 = vpop.trf.xlu0
        %v2132 = vpop.trf.xlu0
        %v2133 = vpop.trf.xlu0
        %v2134 = vpop.trf.xlu0
        %v2135 = vpop.trf.xlu0
        %v2136 = vpop.trf.xlu0
        %v2137 = vpop.trf.xlu0
        %v2138 = vpop.trf.xlu0
        %v2139 = vpop.trf.xlu0
        %v2140 = vpop.trf.xlu0
        %v2141 = vrot.slane %v2093, 4
        %v2142 = vsel %vm760, %v2141, %v2029
        %v2143 = vrot.slane %v2029, 4
        %v2144 = vsel %vm760, %v2093, %v2143
        %v2146 = vunpack.c.l.s4 1983009808
        %v2147 = vunpack.c.0.s8 %v2146
        %v2148 = vperm.slane %v2142, %v2147
        %v2150 = vunpack.c.l.s4 1983009808
        %v2151 = vunpack.c.0.s8 %v2150
        %v2152 = vperm.slane %v2144, %v2151
        %v2153 = vrot.slane %v2125, 4
        %v2154 = vsel %vm760, %v2153, %v2061
        %v2155 = vrot.slane %v2061, 4
        %v2156 = vsel %vm760, %v2125, %v2155
        %v2158 = vunpack.c.l.s4 1983009808
        %v2159 = vunpack.c.0.s8 %v2158
        %v2160 = vperm.slane %v2154, %v2159
        %v2162 = vunpack.c.l.s4 1983009808
        %v2163 = vunpack.c.0.s8 %v2162
        %v2164 = vperm.slane %v2156, %v2163
        %v2165 = vrot.slane %v2160, 4
        %v2166 = vsel %vm760, %v2165, %v2148
        %v2167 = vrot.slane %v2148, 4
        %v2168 = vsel %vm760, %v2160, %v2167
        %v2170 = vunpack.c.l.s4 1934713408
        %v2171 = vunpack.c.0.s8 %v2170
        %v2172 = vperm.slane %v2166, %v2171
        %v2174 = vunpack.c.l.s4 1934713408
        %v2175 = vunpack.c.0.s8 %v2174
        %v2176 = vperm.slane %v2168, %v2175
        %v2177 = vrot.slane %v2164, 4
        %v2178 = vsel %vm760, %v2177, %v2152
        %v2179 = vrot.slane %v2152, 4
        %v2180 = vsel %vm760, %v2164, %v2179
        %v2182 = vunpack.c.l.s4 1934713408
        %v2183 = vunpack.c.0.s8 %v2182
        %v2184 = vperm.slane %v2178, %v2183
        %v2186 = vunpack.c.l.s4 1934713408
        %v2187 = vunpack.c.0.s8 %v2186
        %v2188 = vperm.slane %v2180, %v2187
        %v2189 = vrot.slane %v2172, 4
        %v2190 = vsel %vm760, 0.0, %v2189
        %v2191 = vrot.slane %v2176, 4
        %v2192 = vsel %vm760, 0.0, %v2191
        %v2193 = vrot.slane %v2184, 4
        %v2194 = vsel %vm760, 0.0, %v2193
        %v2195 = vrot.slane %v2188, 4
        %v2196 = vsel %vm760, 0.0, %v2195
        %v2197 = vrcp.pop %v1527
        %v2198 = vrcp.pop %v1530
        %v2199 = vrcp.pop %v1533
        %v2200 = vrcp.pop %v1536
        %v2201 = vrot.slane %v2199, 4
        %v2202 = vsel %vm760, %v2201, %v2197
        %v2203 = vrot.slane %v2197, 4
        %v2204 = vsel %vm760, %v2199, %v2203
        %v2206 = vunpack.c.l.s4 1983009808
        %v2207 = vunpack.c.0.s8 %v2206
        %v2208 = vperm.slane %v2202, %v2207
        %v2210 = vunpack.c.l.s4 1983009808
        %v2211 = vunpack.c.0.s8 %v2210
        %v2212 = vperm.slane %v2204, %v2211
        %v2213 = vrot.slane %v2200, 4
        %v2214 = vsel %vm760, %v2213, %v2198
        %v2215 = vrot.slane %v2198, 4
        %v2216 = vsel %vm760, %v2200, %v2215
        %v2218 = vunpack.c.l.s4 1983009808
        %v2219 = vunpack.c.0.s8 %v2218
        %v2220 = vperm.slane %v2214, %v2219
        %v2222 = vunpack.c.l.s4 1983009808
        %v2223 = vunpack.c.0.s8 %v2222
        %v2224 = vperm.slane %v2216, %v2223
        %v2225 = vrot.slane %v2220, 4
        %v2226 = vsel %vm760, %v2225, %v2208
        %v2227 = vrot.slane %v2208, 4
        %v2228 = vsel %vm760, %v2220, %v2227
        %v2230 = vunpack.c.l.s4 1934713408
        %v2231 = vunpack.c.0.s8 %v2230
        %v2232 = vperm.slane %v2226, %v2231
        %v2234 = vunpack.c.l.s4 1934713408
        %v2235 = vunpack.c.0.s8 %v2234
        %v2236 = vperm.slane %v2228, %v2235
        %v2237 = vrot.slane %v2224, 4
        %v2238 = vsel %vm760, %v2237, %v2212
        %v2239 = vrot.slane %v2212, 4
        %v2240 = vsel %vm760, %v2224, %v2239
        %v2242 = vunpack.c.l.s4 1934713408
        %v2243 = vunpack.c.0.s8 %v2242
        %v2244 = vperm.slane %v2238, %v2243
        %v2246 = vunpack.c.l.s4 1934713408
        %v2247 = vunpack.c.0.s8 %v2246
        %v2248 = vperm.slane %v2240, %v2247
        %v2249 = vrot.slane %v2232, 4
        %v2250 = vsel %vm760, 0.0, %v2249
        %v2251 = vrot.slane %v2236, 4
        %v2252 = vsel %vm760, 0.0, %v2251
        %v2253 = vrot.slane %v2244, 4
        %v2254 = vsel %vm760, 0.0, %v2253
        %v2255 = vrot.slane %v2248, 4
        %v2256 = vsel %vm760, 0.0, %v2255
        %2258 = vset.pattern.permute.xlu0 0
        %2259 = vperm.xlu0 %2258, %v2232
        %v2260 = vpop.permute.xlu0 %2259
        %2263 = vset.pattern.permute.xlu0 0
        %2264 = vperm.xlu0 %2263, %v2250
        %v2265 = vpop.permute.xlu0 %2264
        %2268 = vset.pattern.permute.xlu0 0
        %2269 = vperm.xlu0 %2268, %v2236
        %v2270 = vpop.permute.xlu0 %2269
        %2273 = vset.pattern.permute.xlu0 0
        %2274 = vperm.xlu0 %2273, %v2252
        %v2275 = vpop.permute.xlu0 %2274
        %2278 = vset.pattern.permute.xlu0 0
        %2279 = vperm.xlu0 %2278, %v2244
        %v2280 = vpop.permute.xlu0 %2279
        %2283 = vset.pattern.permute.xlu0 0
        %2284 = vperm.xlu0 %2283, %v2254
        %v2285 = vpop.permute.xlu0 %2284
        %2288 = vset.pattern.permute.xlu0 0
        %2289 = vperm.xlu0 %2288, %v2248
        %v2290 = vpop.permute.xlu0 %2289
        %2293 = vset.pattern.permute.xlu0 0
        %2294 = vperm.xlu0 %2293, %v2256
        %v2295 = vpop.permute.xlu0 %2294
        %v2297 = vmul.f32 %v2172, %v2260
        %v2298 = vmul.f32 %v2190, %v2265
        %v2299 = vmul.f32 %v2176, %v2270
        %v2300 = vmul.f32 %v2192, %v2275
        %v2301 = vmul.f32 %v2184, %v2280
        %v2302 = vmul.f32 %v2194, %v2285
        %v2303 = vmul.f32 %v2188, %v2290
        %v2304 = vmul.f32 %v2196, %v2295
        %v2305 = vrot.slane %v2299, 4
        %v2306 = vsel %vm760, %v2305, %v2297
        %v2308 = vunpack.c.l.s4 1983009808
        %v2309 = vunpack.c.0.s8 %v2308
        %v2310 = vperm.slane %v2306, %v2309
        %v2311 = vrot.slane %v2300, 4
        %v2312 = vsel %vm760, %v2311, %v2298
        %v2314 = vunpack.c.l.s4 1983009808
        %v2315 = vunpack.c.0.s8 %v2314
        %v2316 = vperm.slane %v2312, %v2315
        %v2317 = vrot.slane %v2303, 4
        %v2318 = vsel %vm760, %v2317, %v2301
        %v2320 = vunpack.c.l.s4 1983009808
        %v2321 = vunpack.c.0.s8 %v2320
        %v2322 = vperm.slane %v2318, %v2321
        %v2323 = vrot.slane %v2304, 4
        %v2324 = vsel %vm760, %v2323, %v2302
        %v2326 = vunpack.c.l.s4 1983009808
        %v2327 = vunpack.c.0.s8 %v2326
        %v2328 = vperm.slane %v2324, %v2327
        %v2329 = vrot.slane %v2316, 4
        %v2330 = vsel %vm760, %v2329, %v2310
        %v2331 = vrot.slane %v2310, 4
        %v2332 = vsel %vm760, %v2316, %v2331
        %v2334 = vunpack.c.l.s4 1934713408
        %v2335 = vunpack.c.0.s8 %v2334
        %v2336 = vperm.slane %v2330, %v2335
        %v2338 = vunpack.c.l.s4 1934713408
        %v2339 = vunpack.c.0.s8 %v2338
        %v2340 = vperm.slane %v2332, %v2339
        %v2341 = vrot.slane %v2328, 4
        %v2342 = vsel %vm760, %v2341, %v2322
        %v2343 = vrot.slane %v2322, 4
        %v2344 = vsel %vm760, %v2328, %v2343
        %v2346 = vunpack.c.l.s4 1934713408
        %v2347 = vunpack.c.0.s8 %v2346
        %v2348 = vperm.slane %v2342, %v2347
        %v2350 = vunpack.c.l.s4 1934713408
        %v2351 = vunpack.c.0.s8 %v2350
        %v2352 = vperm.slane %v2344, %v2351
        %v2353 = vrot.slane %v2348, 4
        %v2354 = vsel %vm760, %v2353, %v2336
        %v2355 = vrot.slane %v2336, 4
        %v2356 = vsel %vm760, %v2348, %v2355
        %v2357 = vrot.slane %v2352, 4
        %v2358 = vsel %vm760, %v2357, %v2340
        %v2359 = vrot.slane %v2340, 4
        %v2360 = vsel %vm760, %v2352, %v2359
        %2362 = vrot.lane.b32.xlu0 %v2356, 8
        %v2363 = vpop.permute.xlu0 %2362
        %2366 = vrot.lane.b32.xlu0 %v2358, 16
        %v2367 = vpop.permute.xlu0 %2366
        %2370 = vrot.lane.b32.xlu0 %v2360, 24
        %v2371 = vpop.permute.xlu0 %2370
        %v2373 = vsel %vm1423, %v2354, %v2363
        %vm2374 = vcmask 130048
        %v2375 = vsel %vm2374, %v2373, %v2367
        %vm2376 = vcmask 195584
        %v2377 = vsel %vm2376, %v2375, %v2371
        %v2378 = vpack.c.bf16 %v2377, %v2377
        %v2379 = vld [vmem:[#allocation14] sm:$0xf]
        %v2380 = vld [vmem:[#allocation14 + $0x4] sm:$0xf]
        %v2381 = vld [vmem:[#allocation14 + $0x8] sm:$0xf]
        %v2382 = vld [vmem:[#allocation14 + $0xc] sm:$0xf]
        %v2383 = vld [vmem:[%s11] sm:$0x1]
        %v2385 = vperm.slane %v2383, 0
        %v2391 = vunpack.c.l.b16 %v2379
        %v2392 = vunpack.c.l.b16 %v2380
        %v2393 = vunpack.c.l.b16 %v2381
        %v2394 = vunpack.c.l.b16 %v2382
        %v2395 = vpack.c.b16 %v2392, %v2391
        %v2396 = vpack.c.b16 %v2394, %v2393
        %v2400 = vsel %vm657, %v2378, 0
        %2402 = vmatpush.bf16.msra.mxu0 0
        %2403 = vmatpush.bf16.msra.mxu0 0
        %2404 = vmatpush.bf16.msra.mxu0 0
        %2405 = vmatpush.bf16.msra.mxu0 0
        %2406 = vmatpush.bf16.msra.mxu0 0
        %2407 = vmatpush.bf16.msra.mxu0 0
        %2408 = vmatpush.bf16.msra.mxu0 %v2396
        %2409 = vmatpush.bf16.msra.mxu0 %v2395
        %2410 = vmatmul.bf16.gmra.mxu0 %v2400
        %v2411 = vpop.f32.mrf.mxu0
        %v2412 = vadd.f32 %v2385, %v2411
        %v2413 = vpop.f32.mrf.mxu0
        %2414 = vdwg.mxu0
        %2415 = vst.msk [vmem:[%s630] sm:$0xff] %vm657, %v2412
        %s2416 = sand.u32 %s335, 1
        %s2417 = scalar_lea.sflag [#allocation4], %s2416
        %s2418 = sand.u32 %s335, 1
        %s2419 = smul.addr %s2418, 8
        %s2420 = scalar_lea.vmem [#allocation16], %s2419
        // Predicated region
        $region101: #{tpu_custom_call.1} parent=67 // pred_check
          %p2421 = pneg %p345
        $region102: #{tpu_custom_call.1} parent=67 // pred_check_branch
          %2423 = sbr.rel (%p2421) target = $region104
        $region103: #{tpu_custom_call.1} parent=67 // pred_region
          %2425 = vsyncadd %s2417, 0
          %s2426 = sadd.s32 %s42, %s41
          %s2427 = smul.addr %s2426, 8
          %s2428 = scalar_lea.hbm %s12, %s2427
          %s2430 = sshll.u32 %s2420, 4
          %s2431 = int_to_ptr.vmem [resolvable:$true] %s2430
          %s2432 = sshll.u32 %s2428, 4
          %s2433 = int_to_ptr.hbm [resolvable:$true] %s2432
          %2435 = dma.vmem_to_hbm [thread:$0]  %s2431, 128, %s2433, %s2417
        $region104: #{tpu_custom_call.1} parent=67 // pred_fallthru
          _
      $region68: #{tpu_custom_call.1} parent=5 // pred_fallthru
        _
      %p2436 = scmp.le.s32.totalorder 2, %s32
      // Predicated region
      $region105: #{tpu_custom_call.1} parent=5 // pred_check
        %p2437 = pneg %p2436
      $region106: #{tpu_custom_call.1} parent=5 // pred_check_branch
        %2439 = sbr.rel (%p2437) target = $region108
      $region107: #{tpu_custom_call.1} parent=5 // pred_region
        %s2440 = ssub.s32 %s32, 2
        // Predicated region
        $region109: #{tpu_custom_call.1} parent=107 // pred_check
          %p2441 = pneg %p351
        $region110: #{tpu_custom_call.1} parent=107 // pred_check_branch
          %2443 = sbr.rel (%p2441) target = $region112
        $region111: #{tpu_custom_call.1} parent=107 // pred_region
          %s2444 = sand.u32 %s336, 1
          %s2445 = scalar_lea.sflag [#allocation4], %s2444
          %s2446 = sand.u32 %s336, 1
          %s2447 = smul.addr %s2446, 8
          %s2448 = scalar_lea.vmem [#allocation16], %s2447
          %2450 = dma.done %s2445, 128
        $region112: #{tpu_custom_call.1} parent=107 // pred_fallthru
          _
      $region108: #{tpu_custom_call.1} parent=5 // pred_fallthru
        _
    $region6: #{tpu_custom_call.1} parent=1 // loop_footer
      %s36 = sadd.s32 1, %s32
    $region7: #{tpu_custom_call.1} parent=1 // loop_footer_branch
      %31 = sbr.rel target = $region3
    $region8: #{tpu_custom_call.1} parent=1 // loop_exit
      _
    %2451 = vsyncpa [#allocation3], 1
    %s2452 = scalar_lea.sflag [#allocation3], 1
    %2453 = vsyncpa %s2452, 1
    %2454 = vsyncpa [#allocation6], 1
    %s2455 = scalar_lea.sflag [#allocation6], 1
    %2456 = vsyncpa %s2455, 1
    %2457 = vsyncpa [#allocation9], 1
    %s2458 = scalar_lea.sflag [#allocation9], 1
    %2459 = vsyncpa %s2458, 1
    %2460 = vsyncpa [#allocation12], 1
    %2461 = vsyncpa [#allocation15], 1
    %2462 = vsyncpa [#allocation4], 1
    %s2463 = scalar_lea.sflag [#allocation4], 1
    %2464 = vsyncpa %s2463, 1

</llo_original>
